<compile_context>
chip_gen: v5e
topology: v5e:2x2
jax: 0.10.0
libtpu: 0.0.40
codegen_flags: <defaults>
</compile_context>

<pallas_src>
import jax
import jax.numpy as jnp
import numpy as np
from jax.experimental import pallas as pl
from jax.experimental.pallas import tpu as pltpu


def _fixed_size_memory_kernel(len_ref, ctx_ref, w_ref, b_ref, out_ref):
    """One grid step handles TB batch elements.

    len_ref : VMEM (TB, 1) int32  -- per-row valid lengths for this tile
    ctx_ref : VMEM (TB, L, D)     -- this tile's context rows
    w_ref   : VMEM (D, M)         -- linear weight (already transposed)
    b_ref   : VMEM (1, M)         -- linear bias
    out_ref : VMEM (TB, M, D)     -- fixed-size memory output
    """
    ctx = ctx_ref[...]                              # (TB, L, D), input dtype
    TB, L, D = ctx.shape
    M = w_ref.shape[1]

    # ---- attn = ctx @ W^T + b ------------------------------------------------
    # One fused (TB*L, D) @ (D, M) MXU matmul when collapsing the leading dims
    # is a free relayout (L a multiple of the dtype's sublane tile: 8 for f32,
    # 16 for bf16); otherwise a batched einsum with no reshape.
    sublane = 8 * max(1, 4 // jnp.dtype(ctx.dtype).itemsize)
    bias_f32 = b_ref[...].astype(jnp.float32)       # (1, M)
    if L % sublane == 0:
        attn2d = jnp.dot(ctx.reshape(TB * L, D), w_ref[...],
                         preferred_element_type=jnp.float32)
        attn = (attn2d + bias_f32).reshape(TB, L, M)           # (TB, L, M), f32
    else:
        attn = jnp.einsum("bld,dm->blm", ctx, w_ref[...],
                          preferred_element_type=jnp.float32)
        attn = attn + bias_f32[None]                           # (TB, L, M), f32

    # ---- length mask + softmax over L (axis=1), f32 math ----------------------
    # Vectorized mask: ONE (TB, L, 1) compare against the VMEM lengths tile;
    # jnp.where broadcasts it along M.  Mask applied AFTER exp: no -inf
    # arithmetic, and a fully-masked row (length == 0, e.g. batch padding)
    # yields zeros instead of NaN.  (PyTorch reference is NaN there; for
    # length >= 1 results match.)
    lens = len_ref[...].reshape(TB, 1, 1)           # (TB, 1, 1) int32
    pos = jax.lax.broadcasted_iota(jnp.int32, (TB, L, 1), 1)
    valid = pos < lens                               # (TB, L, 1)

    neg_big = jnp.float32(-1e30)
    m = jnp.max(jnp.where(valid, attn, neg_big), axis=1, keepdims=True)   # (TB,1,M)
    e = jnp.where(valid, jnp.exp(attn - m), jnp.float32(0.0))             # (TB,L,M)
    s = jnp.maximum(jnp.sum(e, axis=1, keepdims=True), jnp.float32(1e-30))
    p = e * pl.reciprocal(s, approx=False)          # exact: kernel is not EUP-bound

    # ---- memory[b] = p[b]^T @ ctx[b] ------------------------------------------
    # Batched contraction over L with no materialized transpose; operands kept
    # in the input dtype so a bf16 production path stays single-pass on the MXU
    # (accumulation is f32 via preferred_element_type).
    mem = jnp.einsum("blm,bld->bmd", p.astype(ctx.dtype), ctx,
                     preferred_element_type=jnp.float32)                  # (TB,M,D)

    # TODO(synk): nn.Dropout is identity in eval mode; training-mode dropout
    # would use pltpu.prng_seed + pltpu.prng_random_bits here.
    out_ref[...] = mem.astype(out_ref.dtype)


def fixed_size_memory(ctx, length, weight_t, bias, *, batch_tile=8, out_dtype=None):
    """ctx: (B, L, D), length: (B,) int32 or None, weight_t: (D, M), bias: (1, M).

    Returns the fixed-size memory of shape (B, M, D) (PyTorch: (B, mem_size, input_dim)).
    Pass out_dtype=jnp.bfloat16 on production paths to halve the dominant HBM write.
    """
    B, L, D = ctx.shape
    M = weight_t.shape[1]
    if out_dtype is None:
        out_dtype = ctx.dtype
    if length is None:
        length = jnp.full((B,), L, dtype=jnp.int32)

    # Batch tile: a multiple of 8 (sublane) so the (Bp, 1) lengths block is a
    # legal BlockSpec, and capped near ceil(B/2) so the grid keeps >= 2
    # "parallel" steps whenever the batch allows it (feeds both TCs on v7x).
    tb = max(8, min(batch_tile, 8 * pl.cdiv(pl.cdiv(B, 2), 8)))
    n_steps = pl.cdiv(B, tb)
    Bp = tb * n_steps

    if Bp != B:
        # Pad the batch instead of degrading the tile size; padded rows get
        # length 0 -> zero output rows, sliced off below.
        ctx = jnp.pad(ctx, ((0, Bp - B), (0, 0), (0, 0)))
        length = jnp.pad(length, (0, Bp - B))
    lens2d = length.astype(jnp.int32).reshape(Bp, 1)

    # VMEM budget: double-buffered blocks + ~4 live f32 (tb, L, M) temporaries,
    # clamped to the v7x-safe [32 MiB, 64 MiB] range.
    in_sz = jnp.dtype(ctx.dtype).itemsize
    out_sz = jnp.dtype(out_dtype).itemsize
    w_sz = jnp.dtype(weight_t.dtype).itemsize
    vmem_bytes = (2 * tb * L * D * in_sz + 2 * tb * M * D * out_sz
                  + 2 * (D * M + M) * w_sz + 2 * tb * 4
                  + 4 * tb * L * M * 4 + (4 << 20))
    vmem_limit = int(min(64 << 20, max(32 << 20, vmem_bytes)))

    grid_spec = pltpu.PrefetchScalarGridSpec(
        num_scalar_prefetch=0,
        grid=(n_steps,),
        in_specs=[
            pl.BlockSpec((tb, 1), lambda i: (i, 0)),         # lengths (VMEM)
            pl.BlockSpec((tb, L, D), lambda i: (i, 0, 0)),   # ctx tile
            pl.BlockSpec((D, M), lambda i: (0, 0)),          # weight (resident)
            pl.BlockSpec((1, M), lambda i: (0, 0)),          # bias (resident)
        ],
        out_specs=pl.BlockSpec((tb, M, D), lambda i: (i, 0, 0)),
    )
    out = pl.pallas_call(
        _fixed_size_memory_kernel,
        out_shape=jax.ShapeDtypeStruct((Bp, M, D), out_dtype),
        grid_spec=grid_spec,
        compiler_params=pltpu.CompilerParams(
            # Batch axis is independent -> shards across the 2 TCs on v7x.
            dimension_semantics=("parallel",),
            vmem_limit_bytes=vmem_limit),
    )(lens2d, ctx, weight_t, bias)
    return out[:B] if Bp != B else out


def _reference(ctx, length, weight_t, bias):
    """Pure-JAX reference mirroring the PyTorch forward."""
    L = ctx.shape[1]
    attn = jnp.einsum("bld,dm->blm", ctx, weight_t) + bias[0]
    mask = jnp.arange(L)[None, :] >= length[:, None]            # (B, L)
    attn = jnp.where(mask[:, :, None], -jnp.inf, attn)
    attn = jax.nn.softmax(attn, axis=1)
    return jnp.einsum("blm,bld->bmd", attn, ctx)


if __name__ == "__main__":
    # batch, max_len, input_dim, mem_size -- lane-dense D/M (multiples of 128).
    B, L, D, M = 16, 8, 128, 128

    key = jax.random.PRNGKey(0)
    k_ctx, k_w, k_b = jax.random.split(key, 3)

    ctx = jax.random.normal(k_ctx, (B, L, D), dtype=jnp.float32)
    # nn.Linear(input_dim, mem_size): weight (M, D), bias (M,).
    # Store the weight pre-transposed as (D, M) for row-major matmuls.
    weight = jax.random.normal(k_w, (M, D), dtype=jnp.float32) * (1.0 / np.sqrt(D))
    bias = jax.random.normal(k_b, (M,), dtype=jnp.float32) * 0.01
    weight_t = weight.T                       # (D, M)
    bias2d = bias[None, :]                    # (1, M)
    length = jnp.array([8, 5, 3, 1, 7, 8, 2, 6, 4, 8, 5, 7, 1, 3, 8, 6],
                       dtype=jnp.int32)

    out = fixed_size_memory(ctx, length, weight_t, bias2d, batch_tile=8)
    out = jax.block_until_ready(out)

    ref = _reference(ctx, length, weight_t, bias2d)
    # Exact softmax reciprocal now -> tolerance tightened from 5e-3 to 1e-3;
    # the remaining slack only covers XLA-vs-Mosaic default f32 matmul
    # precision differences, not softmax math.
    np.testing.assert_allclose(np.asarray(out), np.asarray(ref),
                               rtol=1e-3, atol=1e-3)
    print("KERNEL_OK")
</pallas_src>

<mosaic_0001>
module attributes {stable_mosaic.version = 11 : i64} {
  func.func @_fixed_size_memory_kernel(%arg0: i32, %arg1: memref<8x1xi32, #tpu.memory_space<vmem>>, %arg2: memref<8x8x128xf32, #tpu.memory_space<vmem>>, %arg3: memref<128x128xf32, #tpu.memory_space<vmem>>, %arg4: memref<1x128xf32, #tpu.memory_space<vmem>>, %arg5: memref<8x128x128xf32, #tpu.memory_space<vmem>>) attributes {dimension_semantics = [#tpu.dimension_semantics<parallel>], iteration_bounds = array<i64: 2>, scalar_prefetch = 0 : i64, scratch_operands = 0 : i64, tpu.core_type = #tpu.core_type<tc>, window_params = [{transform_indices = @transform_0, window_bounds = array<i64: 8, 1>}, {transform_indices = @transform_1, window_bounds = array<i64: 8, 8, 128>}, {pipeline_mode = #tpu.pipeline_mode<synchronous>, transform_indices = @transform_2, window_bounds = array<i64: 128, 128>}, {pipeline_mode = #tpu.pipeline_mode<synchronous>, transform_indices = @transform_3, window_bounds = array<i64: 1, 128>}, {transform_indices = @transform_4, window_bounds = array<i64: 8, 128, 128>}]} {
    %c0 = arith.constant 0 : index
    %c0_0 = arith.constant 0 : index
    %c0_1 = arith.constant 0 : index
    %0 = vector.load %arg2[%c0, %c0_0, %c0_1] : memref<8x8x128xf32, #tpu.memory_space<vmem>>, vector<8x8x128xf32>
    %c0_2 = arith.constant 0 : index
    %c0_3 = arith.constant 0 : index
    %1 = vector.load %arg4[%c0_2, %c0_3] : memref<1x128xf32, #tpu.memory_space<vmem>>, vector<1x128xf32>
    %2 = vector.shape_cast %0 : vector<8x8x128xf32> to vector<64x128xf32>
    %c0_4 = arith.constant 0 : index
    %c0_5 = arith.constant 0 : index
    %3 = vector.load %arg3[%c0_4, %c0_5] : memref<128x128xf32, #tpu.memory_space<vmem>>, vector<128x128xf32>
    %cst = arith.constant dense<0.000000e+00> : vector<64x128xf32>
    %4 = tpu.matmul %2, %3, %cst {dimension_numbers = #tpu.dot_dimension_numbers<[1], [0], [0], [1], [0, 0, 1, 1], [], []>} : vector<64x128xf32>, vector<128x128xf32>, vector<64x128xf32> -> vector<64x128xf32>
    %5 = vector.broadcast %1 : vector<1x128xf32> to vector<64x128xf32>
    %6 = arith.addf %4, %5 : vector<64x128xf32>
    %7 = vector.shape_cast %6 : vector<64x128xf32> to vector<8x8x128xf32>
    %c0_6 = arith.constant 0 : index
    %c0_7 = arith.constant 0 : index
    %8 = vector.load %arg1[%c0_6, %c0_7] : memref<8x1xi32, #tpu.memory_space<vmem>>, vector<8x1xi32>
    %9 = vector.shape_cast %8 : vector<8x1xi32> to vector<8x1x1xi32>
    %10 = tpu.iota {dimensions = array<i32: 1>} : vector<8x8x1xi32>
    %11 = vector.broadcast %9 : vector<8x1x1xi32> to vector<8x8x1xi32>
    %12 = arith.cmpi slt, %10, %11 : vector<8x8x1xi32>
    %cst_8 = arith.constant -1.000000e+30 : f32
    %13 = vector.shape_cast %12 : vector<8x8x1xi1> to vector<8x8x1xi1>
    %14 = vector.broadcast %13 : vector<8x8x1xi1> to vector<8x8x128xi1>
    %15 = vector.broadcast %cst_8 : f32 to vector<8x8x128xf32>
    %16 = arith.select %14, %7, %15 : vector<8x8x128xi1>, vector<8x8x128xf32>
    %cst_9 = arith.constant dense<0xFF800000> : vector<8x128xf32>
    %17 = vector.multi_reduction <maximumf>, %16, %cst_9 [1] : vector<8x8x128xf32> to vector<8x128xf32>
    %18 = vector.shape_cast %17 : vector<8x128xf32> to vector<8x1x128xf32>
    %19 = vector.broadcast %18 : vector<8x1x128xf32> to vector<8x8x128xf32>
    %20 = arith.subf %7, %19 : vector<8x8x128xf32>
    %21 = math.exp %20 : vector<8x8x128xf32>
    %cst_10 = arith.constant 0.000000e+00 : f32
    %22 = vector.shape_cast %12 : vector<8x8x1xi1> to vector<8x8x1xi1>
    %23 = vector.broadcast %22 : vector<8x8x1xi1> to vector<8x8x128xi1>
    %24 = vector.broadcast %cst_10 : f32 to vector<8x8x128xf32>
    %25 = arith.select %23, %21, %24 : vector<8x8x128xi1>, vector<8x8x128xf32>
    %cst_11 = arith.constant dense<0.000000e+00> : vector<8x128xf32>
    %26 = vector.multi_reduction <add>, %25, %cst_11 [1] : vector<8x8x128xf32> to vector<8x128xf32>
    %27 = vector.shape_cast %26 : vector<8x128xf32> to vector<8x1x128xf32>
    %cst_12 = arith.constant 1.000000e-30 : f32
    %28 = vector.broadcast %cst_12 : f32 to vector<8x1x128xf32>
    %29 = arith.maximumf %27, %28 : vector<8x1x128xf32>
    %30 = tpu.reciprocal %29 : vector<8x1x128xf32> -> vector<8x1x128xf32>
    %31 = vector.broadcast %30 : vector<8x1x128xf32> to vector<8x8x128xf32>
    %32 = arith.mulf %25, %31 : vector<8x8x128xf32>
    "tpu.trace_start"() <{level = 10 : i32, message = "blm,bld->bmd"}> : () -> ()
    %cst_13 = arith.constant dense<0.000000e+00> : vector<8x128x128xf32>
    %33 = tpu.matmul %32, %0, %cst_13 {dimension_numbers = #tpu.dot_dimension_numbers<[1], [1], [2], [2], [0, 0, 0, 2, 1, 2], [0], [0]>} : vector<8x8x128xf32>, vector<8x8x128xf32>, vector<8x128x128xf32> -> vector<8x128x128xf32>
    "tpu.trace_stop"() : () -> ()
    %c0_14 = arith.constant 0 : index
    %c0_15 = arith.constant 0 : index
    %c0_16 = arith.constant 0 : index
    %34 = vector.load %arg5[%c0_14, %c0_15, %c0_16] : memref<8x128x128xf32, #tpu.memory_space<vmem>>, vector<8x128x128xf32>
    tpu.vector_store %arg5[%c0_14, %c0_15, %c0_16], %33 {strides = array<i32>} : memref<8x128x128xf32, #tpu.memory_space<vmem>>, vector<8x128x128xf32>,
    return
  }
  func.func @transform_0(%arg0: i32) -> (i32, i32) {
    %c0_i32 = arith.constant 0 : i32
    %c0_i32_0 = arith.constant 0 : i32
    return %arg0, %c0_i32 : i32, i32
  }
  func.func @transform_1(%arg0: i32) -> (i32, i32, i32) {
    %c0_i32 = arith.constant 0 : i32
    %c0_i32_0 = arith.constant 0 : i32
    %c0_i32_1 = arith.constant 0 : i32
    return %arg0, %c0_i32, %c0_i32_0 : i32, i32, i32
  }
  func.func @transform_2(%arg0: i32) -> (i32, i32) {
    %c0_i32 = arith.constant 0 : i32
    %c0_i32_0 = arith.constant 0 : i32
    %c0_i32_1 = arith.constant 0 : i32
    return %c0_i32, %c0_i32_0 : i32, i32
  }
  func.func @transform_3(%arg0: i32) -> (i32, i32) {
    %c0_i32 = arith.constant 0 : i32
    %c0_i32_0 = arith.constant 0 : i32
    %c0_i32_1 = arith.constant 0 : i32
    return %c0_i32, %c0_i32_0 : i32, i32
  }
  func.func @transform_4(%arg0: i32) -> (i32, i32, i32) {
    %c0_i32 = arith.constant 0 : i32
    %c0_i32_0 = arith.constant 0 : i32
    %c0_i32_1 = arith.constant 0 : i32
    return %arg0, %c0_i32, %c0_i32_0 : i32, i32, i32
  }
}

</mosaic_0001>

<llo_original>
// kernel: tpu_custom_call.1
$region0: #{tpu_custom_call.1}
  #allocation0 [shape = 'u32[]', space=smem, size = 0x4, offset = 0x4, fixed_abs, tag = 'smem constant byte address 0x4 - core index']
  #allocation1 [shape = 'u32[72,128]{1,0:T(1,128)}', space=vmem, size = 0x9000, scoped, tag = 'internal scratch']
  %s0 = inlined_call_operand.vmem [shape: s32[16,1], index: 0, kind: input, shape index: {}]
  %s1 = inlined_call_operand.hbm [shape: f32[16,8,128], index: 1, kind: input, shape index: {}]
  %s2 = inlined_call_operand.hbm [shape: f32[128,128], index: 2, kind: input, shape index: {}]
  %s3 = inlined_call_operand.vmem [shape: f32[1,128], index: 3, kind: input, shape index: {}]
  %s4 = inlined_call_operand.hbm [shape: f32[16,128,128], index: 4, kind: output, shape index: {}]
  %s5 = sld [smem:[#allocation0]]
  $region57: #{tpu_custom_call.1} parent=0
    _
  %s7 = ssub.s32 1, %s5
  %s8 = scalar_select 0, %s7, %s5
  $region1: #{tpu_custom_call.1} parent=0
    #allocation2 [shape = 'u8[65536]{0}', space=vmem, size = 0x10000, scoped, tag = 'input window, operand 1']
    #allocation3 [shape = 's32[2]{0}', space=sflag, size = 0x8, scoped, tag = 'scoped memory for tpu_custom_call.1']
    #allocation4 [shape = 's32[2]{0}', space=sflag, size = 0x8, scoped, tag = 'scoped memory for tpu_custom_call.1']
    #allocation5 [shape = 'u8[65536]{0}', space=vmem, size = 0x10000, scoped, tag = 'input window, operand 2, single buffered']
    #allocation6 [shape = 's32[1]{0}', space=sflag, size = 0x4, scoped, tag = 'scoped memory for tpu_custom_call.1']
    #allocation7 [shape = 'u8[1048576]{0}', space=vmem, size = 0x100000, scoped, tag = 'output window, operand 0']
    %9 = vsyncpa [#allocation3], 0
    %s10 = scalar_lea.sflag [#allocation3], 1
    %11 = vsyncpa %s10, 0
    %12 = vsyncpa [#allocation6], 0
    %13 = vsyncpa [#allocation4], 0
    %s14 = scalar_lea.sflag [#allocation4], 1
    %15 = vsyncpa %s14, 0
    loop: start=0, step=1, limit=4
    $region2: #{tpu_custom_call.1} parent=1 // loop_pre_header
      _
    $region3: #{tpu_custom_call.1} parent=1 // loop_header
      %s17 = sphi 0, %s21
      %p18 = scmp.ge.s32.totalorder %s17, 4
      %s27 = sphi 0, %s29
      %s30 = sphi 0, %s27
      %s31 = sphi 0, %s30
      %s47 = sphi 0, %s31
      %s53 = sphi 0, %s55
      %s56 = sphi 0, %s53
      %s57 = sphi 0, %s56
      %s73 = sphi 0, %s57
      %s77 = sphi 0, %s77
      %s79 = sphi 0, %s77
      %s80 = sphi 0, %s79
      %s94 = sphi 0, %s80
      %s98 = sphi 0, %s98
      %s100 = sphi 0, %s98
      %s101 = sphi 0, %s100
      %s115 = sphi 0, %s101
      %s121 = sphi 0, %s123
      %s124 = sphi 0, %s121
      %s125 = sphi 0, %s124
      %s141 = sphi 0, %s125
    $region4: #{tpu_custom_call.1} parent=1 // loop_header_branch
      %20 = sbr.rel (%p18) target = $region8
    $region5: #{tpu_custom_call.1} parent=1 // loop_body
      %s22 = ssub.s32 %s17, 1
      %s23 = ssub.s32 %s17, 2
      %s24 = sadd.s32 %s17, 1
      %s25 = ssub.s32 %s17, %s24
      %p26 = scmp.eq.s32.totalorder %s25, 0
      %s28 = sadd.s32 %s27, 1
      %s29 = scalar_select %p26, %s27, %s28
      %p32 = pneg %p26
      %p33 = scmp.eq.s32.totalorder %s17, 1
      %p34 = por %p32, %p33
      %p35 = scmp.ne.s32.totalorder %s27, %s30
      %p36 = scmp.eq.s32.totalorder %s17, 0
      %p37 = por %p35, %p36
      %p38 = scmp.ne.s32.totalorder %s27, %s30
      %p39 = scmp.eq.s32.totalorder %s22, 1
      %p40 = por %p38, %p39
      %p41 = scmp.ne.s32.totalorder %s30, %s31
      %p42 = scmp.eq.s32.totalorder %s22, 0
      %p43 = por %p41, %p42
      %p44 = scmp.ne.s32.totalorder %s30, %s31
      %p45 = scmp.eq.s32.totalorder %s23, 1
      %p46 = por %p44, %p45
      %p48 = scmp.ne.s32.totalorder %s31, %s47
      %p49 = scmp.eq.s32.totalorder %s23, 0
      %p50 = por %p48, %p49
      %s51 = ssub.s32 %s17, %s24
      %p52 = scmp.eq.s32.totalorder %s51, 0
      %s54 = sadd.s32 %s53, 1
      %s55 = scalar_select %p52, %s53, %s54
      %p58 = pneg %p52
      %p59 = scmp.eq.s32.totalorder %s17, 1
      %p60 = por %p58, %p59
      %p61 = scmp.ne.s32.totalorder %s53, %s56
      %p62 = scmp.eq.s32.totalorder %s17, 0
      %p63 = por %p61, %p62
      %p64 = scmp.ne.s32.totalorder %s53, %s56
      %p65 = scmp.eq.s32.totalorder %s22, 1
      %p66 = por %p64, %p65
      %p67 = scmp.ne.s32.totalorder %s56, %s57
      %p68 = scmp.eq.s32.totalorder %s22, 0
      %p69 = por %p67, %p68
      %p70 = scmp.ne.s32.totalorder %s56, %s57
      %p71 = scmp.eq.s32.totalorder %s23, 1
      %p72 = por %p70, %p71
      %p74 = scmp.ne.s32.totalorder %s57, %s73
      %p75 = scmp.eq.s32.totalorder %s23, 0
      %p76 = por %p74, %p75
      %s78 = sadd.s32 %s77, 1
      %p81 = scmp.eq.s32.totalorder %s17, 1
      %p82 = scmp.ne.s32.totalorder %s77, %s79
      %p83 = scmp.eq.s32.totalorder %s17, 0
      %p84 = por %p82, %p83
      %p85 = scmp.ne.s32.totalorder %s77, %s79
      %p86 = scmp.eq.s32.totalorder %s22, 1
      %p87 = por %p85, %p86
      %p88 = scmp.ne.s32.totalorder %s79, %s80
      %p89 = scmp.eq.s32.totalorder %s22, 0
      %p90 = por %p88, %p89
      %p91 = scmp.ne.s32.totalorder %s79, %s80
      %p92 = scmp.eq.s32.totalorder %s23, 1
      %p93 = por %p91, %p92
      %p95 = scmp.ne.s32.totalorder %s80, %s94
      %p96 = scmp.eq.s32.totalorder %s23, 0
      %p97 = por %p95, %p96
      %s99 = sadd.s32 %s98, 1
      %p102 = scmp.eq.s32.totalorder %s17, 1
      %p103 = scmp.ne.s32.totalorder %s98, %s100
      %p104 = scmp.eq.s32.totalorder %s17, 0
      %p105 = por %p103, %p104
      %p106 = scmp.ne.s32.totalorder %s98, %s100
      %p107 = scmp.eq.s32.totalorder %s22, 1
      %p108 = por %p106, %p107
      %p109 = scmp.ne.s32.totalorder %s100, %s101
      %p110 = scmp.eq.s32.totalorder %s22, 0
      %p111 = por %p109, %p110
      %p112 = scmp.ne.s32.totalorder %s100, %s101
      %p113 = scmp.eq.s32.totalorder %s23, 1
      %p114 = por %p112, %p113
      %p116 = scmp.ne.s32.totalorder %s101, %s115
      %p117 = scmp.eq.s32.totalorder %s23, 0
      %p118 = por %p116, %p117
      %s119 = ssub.s32 %s17, %s24
      %p120 = scmp.eq.s32.totalorder %s119, 0
      %s122 = sadd.s32 %s121, 1
      %s123 = scalar_select %p120, %s121, %s122
      %p126 = pneg %p120
      %p127 = scmp.eq.s32.totalorder %s17, 1
      %p128 = por %p126, %p127
      %p129 = scmp.ne.s32.totalorder %s121, %s124
      %p130 = scmp.eq.s32.totalorder %s17, 0
      %p131 = por %p129, %p130
      %p132 = scmp.ne.s32.totalorder %s121, %s124
      %p133 = scmp.eq.s32.totalorder %s22, 1
      %p134 = por %p132, %p133
      %p135 = scmp.ne.s32.totalorder %s124, %s125
      %p136 = scmp.eq.s32.totalorder %s22, 0
      %p137 = por %p135, %p136
      %p138 = scmp.ne.s32.totalorder %s124, %s125
      %p139 = scmp.eq.s32.totalorder %s23, 1
      %p140 = por %p138, %p139
      %p142 = scmp.ne.s32.totalorder %s125, %s141
      %p143 = scmp.eq.s32.totalorder %s23, 0
      %p144 = por %p142, %p143
      %p145 = scmp.le.s32.totalorder 1, %s17
      %p146 = scmp.lt.s32.totalorder %s17, 3
      %p147 = pnand %p145, %p146
      %p148 = pneg %p147
      // Predicated region
      $region9: #{tpu_custom_call.1} parent=5 // pred_check
        _
      $region10: #{tpu_custom_call.1} parent=5 // pred_check_branch
        %150 = sbr.rel (%p147) target = $region12
      $region11: #{tpu_custom_call.1} parent=5 // pred_region
        %s151 = ssub.s32 %s17, 1
        // Predicated region
        $region13: #{tpu_custom_call.1} parent=11 // pred_check
          %p152 = pneg %p90
        $region14: #{tpu_custom_call.1} parent=11 // pred_check_branch
          %154 = sbr.rel (%p152) target = $region16
        $region15: #{tpu_custom_call.1} parent=11 // pred_region
          %156 = vsyncadd [#allocation6], 0
          %s157 = sshll.u32 %s2, 4
          %s158 = int_to_ptr.hbm [resolvable:$true] %s157
          %s159 = sshll.u32 [#allocation5], 4
          %s160 = int_to_ptr.vmem [resolvable:$true] %s159
          %165 = dma.hbm_to_vmem [thread:$0]  %s158, 2048, %s160, [#allocation6], 128, 128, 8
        $region16: #{tpu_custom_call.1} parent=11 // pred_fallthru
          _
        // Predicated region
        $region17: #{tpu_custom_call.1} parent=11 // pred_check
          %p166 = pneg %p111
        $region18: #{tpu_custom_call.1} parent=11 // pred_check_branch
          %168 = sbr.rel (%p166) target = $region20
        $region19: #{tpu_custom_call.1} parent=11 // pred_region
          _
        $region20: #{tpu_custom_call.1} parent=11 // pred_fallthru
          _
      $region12: #{tpu_custom_call.1} parent=5 // pred_fallthru
        _
      %p169 = scmp.lt.s32.totalorder %s17, 2
      // Predicated region
      $region21: #{tpu_custom_call.1} parent=5 // pred_check
        %p170 = pneg %p169
      $region22: #{tpu_custom_call.1} parent=5 // pred_check_branch
        %172 = sbr.rel (%p170) target = $region24
      $region23: #{tpu_custom_call.1} parent=5 // pred_region
        // Predicated region
        $region25: #{tpu_custom_call.1} parent=23 // pred_check
          %p173 = pneg %p37
        $region26: #{tpu_custom_call.1} parent=23 // pred_check_branch
          %175 = sbr.rel (%p173) target = $region28
        $region27: #{tpu_custom_call.1} parent=23 // pred_region
          %p176 = scmp.lt.s32.totalorder %s17, 1
          %s177 = scalar_select %p176, %s17, 1
          %s178 = smul.addr %s177, 8
          %s179 = scalar_lea.vmem %s0, %s178
        $region28: #{tpu_custom_call.1} parent=23 // pred_fallthru
          _
        // Predicated region
        $region29: #{tpu_custom_call.1} parent=23 // pred_check
          %p180 = pneg %p63
        $region30: #{tpu_custom_call.1} parent=23 // pred_check_branch
          %182 = sbr.rel (%p180) target = $region32
        $region31: #{tpu_custom_call.1} parent=23 // pred_region
          %s183 = sand.u32 %s53, 1
          %s184 = scalar_lea.sflag [#allocation3], %s183
          %s185 = sand.u32 %s53, 1
          %s186 = smul.addr %s185, 64
          %s187 = scalar_lea.vmem [#allocation2], %s186
          %s188 = smul.u32 8, %s17
          %190 = vsyncadd %s184, 0
          %s191 = smul.addr %s188, 8
          %s192 = scalar_lea.hbm %s1, %s191
          %s193 = sshll.u32 %s192, 4
          %s194 = int_to_ptr.hbm [resolvable:$true] %s193
          %s195 = sshll.u32 %s187, 4
          %s196 = int_to_ptr.vmem [resolvable:$true] %s195
          %201 = dma.hbm_to_vmem [thread:$0]  %s194, 1024, %s196, %s184, 128, 128, 8
        $region32: #{tpu_custom_call.1} parent=23 // pred_fallthru
          _
      $region24: #{tpu_custom_call.1} parent=5 // pred_fallthru
        _
      %p202 = scmp.le.s32.totalorder 1, %s17
      %p203 = scmp.lt.s32.totalorder %s17, 3
      %p204 = pnand %p202, %p203
      %p205 = pneg %p204
      // Predicated region
      $region33: #{tpu_custom_call.1} parent=5 // pred_check
        _
      $region34: #{tpu_custom_call.1} parent=5 // pred_check_branch
        %207 = sbr.rel (%p204) target = $region36
      $region35: #{tpu_custom_call.1} parent=5 // pred_region
        %s208 = ssub.s32 %s17, 1
        %s209 = sand.u32 %s56, 1
        %s210 = scalar_lea.sflag [#allocation3], %s209
        %s211 = sand.u32 %s56, 1
        %s212 = smul.addr %s211, 64
        %s213 = scalar_lea.vmem [#allocation2], %s212
        // Predicated region
        $region37: #{tpu_custom_call.1} parent=35 // pred_check
          %p214 = pneg %p69
        $region38: #{tpu_custom_call.1} parent=35 // pred_check_branch
          %216 = sbr.rel (%p214) target = $region40
        $region39: #{tpu_custom_call.1} parent=35 // pred_region
          %218 = dma.done %s210, 1024
        $region40: #{tpu_custom_call.1} parent=35 // pred_fallthru
          _
        // Predicated region
        $region41: #{tpu_custom_call.1} parent=35 // pred_check
          %p219 = pneg %p90
        $region42: #{tpu_custom_call.1} parent=35 // pred_check_branch
          %221 = sbr.rel (%p219) target = $region44
        $region43: #{tpu_custom_call.1} parent=35 // pred_region
          %223 = dma.done [#allocation6], 2048
        $region44: #{tpu_custom_call.1} parent=35 // pred_fallthru
          _
        %p224 = scmp.lt.s32.totalorder %s22, 1
        %s225 = scalar_select %p224, %s22, 1
        %s226 = smul.addr %s225, 8
        %s227 = scalar_lea.vmem %s0, %s226
        %p228 = pneg %p43
        %p229 = pneg %p40
        %s230 = sand.u32 %s56, 1
        %s231 = scalar_lea.sflag [#allocation3], %s230
        %s232 = sand.u32 %s56, 1
        %s233 = smul.addr %s232, 64
        %s234 = scalar_lea.vmem [#allocation2], %s233
        %p235 = pneg %p69
        %p236 = pneg %p66
        %p237 = pneg %p90
        %p238 = pneg %p87
        %p239 = pneg %p111
        %p240 = pneg %p108
        %p241 = pneg %p137
        %p242 = pneg %p134
        %s243 = sand.u32 %s124, 1
        %s244 = scalar_lea.sflag [#allocation4], %s243
        %s245 = sand.u32 %s124, 1
        %s246 = smul.addr %s245, 1024
        %s247 = scalar_lea.vmem [#allocation7], %s246
        %p248 = scmp.lt.s32.totalorder %s22, 1
        %s249 = scalar_select %p248, %s22, 1
        %s250 = smul.addr %s249, 8
        %s251 = scalar_lea.vmem %s0, %s250
        %s252 = smul.u32 8, %s22
        %s253 = smul.u32 8, %s22
        %v254 = vld [vmem:[%s213] sm:$0xff]
        %v255 = vld [vmem:[%s213 + $0x8] sm:$0xff]
        %v256 = vld [vmem:[%s213 + $0x10] sm:$0xff]
        %v257 = vld [vmem:[%s213 + $0x18] sm:$0xff]
        %v258 = vld [vmem:[%s213 + $0x20] sm:$0xff]
        %v259 = vld [vmem:[%s213 + $0x28] sm:$0xff]
        %v260 = vld [vmem:[%s213 + $0x30] sm:$0xff]
        %v261 = vld [vmem:[%s213 + $0x38] sm:$0xff]
        %v262 = vld [vmem:[%s3] sm:$0x1]
        %v263 = vld [vmem:[#allocation5] sm:$0xff]
        %v264 = vld [vmem:[#allocation5 + $0x8] sm:$0xff]
        %v265 = vld [vmem:[#allocation5 + $0x10] sm:$0xff]
        %v266 = vld [vmem:[#allocation5 + $0x18] sm:$0xff]
        %v267 = vld [vmem:[#allocation5 + $0x20] sm:$0xff]
        %v268 = vld [vmem:[#allocation5 + $0x28] sm:$0xff]
        %v269 = vld [vmem:[#allocation5 + $0x30] sm:$0xff]
        %v270 = vld [vmem:[#allocation5 + $0x38] sm:$0xff]
        %v271 = vld [vmem:[#allocation5 + $0x40] sm:$0xff]
        %v272 = vld [vmem:[#allocation5 + $0x48] sm:$0xff]
        %v273 = vld [vmem:[#allocation5 + $0x50] sm:$0xff]
        %v274 = vld [vmem:[#allocation5 + $0x58] sm:$0xff]
        %v275 = vld [vmem:[#allocation5 + $0x60] sm:$0xff]
        %v276 = vld [vmem:[#allocation5 + $0x68] sm:$0xff]
        %v277 = vld [vmem:[#allocation5 + $0x70] sm:$0xff]
        %v278 = vld [vmem:[#allocation5 + $0x78] sm:$0xff]
        %v280 = vperm.slane %v262, 0
        %282 = vmatpush.msra.mxu0 %v278
        %283 = vmatpush.msra.mxu0 %v277
        %284 = vmatpush.msra.mxu0 %v276
        %285 = vmatpush.msra.mxu0 %v275
        %286 = vmatpush.msra.mxu0 %v274
        %287 = vmatpush.msra.mxu0 %v273
        %288 = vmatpush.msra.mxu0 %v272
        %289 = vmatpush.msra.mxu0 %v271
        %290 = vmatpush.msra.mxu0 %v270
        %291 = vmatpush.msra.mxu0 %v269
        %292 = vmatpush.msra.mxu0 %v268
        %293 = vmatpush.msra.mxu0 %v267
        %294 = vmatpush.msra.mxu0 %v266
        %295 = vmatpush.msra.mxu0 %v265
        %296 = vmatpush.msra.mxu0 %v264
        %297 = vmatpush.msra.mxu0 %v263
        %298 = vmatmul.f32.gmra.mxu0 %v254
        %v299 = vpop.f32.mrf.mxu0
        %v300 = vadd.f32 %v280, %v299
        %301 = vmatmul.f32.gmra.mxu0 %v255
        %v302 = vpop.f32.mrf.mxu0
        %v303 = vadd.f32 %v280, %v302
        %304 = vmatmul.f32.gmra.mxu0 %v256
        %v305 = vpop.f32.mrf.mxu0
        %v306 = vadd.f32 %v280, %v305
        %307 = vmatmul.f32.gmra.mxu0 %v257
        %v308 = vpop.f32.mrf.mxu0
        %v309 = vadd.f32 %v280, %v308
        %310 = vmatmul.f32.gmra.mxu0 %v258
        %v311 = vpop.f32.mrf.mxu0
        %v312 = vadd.f32 %v280, %v311
        %313 = vmatmul.f32.gmra.mxu0 %v259
        %v314 = vpop.f32.mrf.mxu0
        %v315 = vadd.f32 %v280, %v314
        %316 = vmatmul.f32.gmra.mxu0 %v260
        %v317 = vpop.f32.mrf.mxu0
        %v318 = vadd.f32 %v280, %v317
        %319 = vmatmul.f32.gmra.mxu0 %v261
        %v320 = vpop.f32.mrf.mxu0
        %v321 = vadd.f32 %v280, %v320
        %322 = vdwg.mxu0
        %v323 = vld [vmem:[%s251] sm:$0xff]
        %v324 = vrot.slane %v323, 1
        %v325 = vrot.slane %v323, 2
        %v326 = vrot.slane %v323, 3
        %v327 = vrot.slane %v323, 4
        %v328 = vrot.slane %v323, 5
        %v329 = vrot.slane %v323, 6
        %v330 = vrot.slane %v323, 7
        %v331 = vlaneseq
        %v332 = vshrl.u32 %v331, 7
        %v333 = vperm.slane %v323, 0
        %v334 = vperm.slane %v324, 0
        %v335 = vperm.slane %v325, 0
        %v336 = vperm.slane %v326, 0
        %v337 = vperm.slane %v327, 0
        %v338 = vperm.slane %v328, 0
        %v339 = vperm.slane %v329, 0
        %v340 = vperm.slane %v330, 0
        %vm341 = vcmp.lt.s32.totalorder %v332, %v333
        %vm342 = vcmp.lt.s32.totalorder %v332, %v334
        %vm343 = vcmp.lt.s32.totalorder %v332, %v335
        %vm344 = vcmp.lt.s32.totalorder %v332, %v336
        %vm345 = vcmp.lt.s32.totalorder %v332, %v337
        %vm346 = vcmp.lt.s32.totalorder %v332, %v338
        %vm347 = vcmp.lt.s32.totalorder %v332, %v339
        %vm348 = vcmp.lt.s32.totalorder %v332, %v340
        %v349 = vsel %vm341, 1, 0
        %v350 = vsel %vm342, 1, 0
        %v351 = vsel %vm343, 1, 0
        %v352 = vsel %vm344, 1, 0
        %v353 = vsel %vm345, 1, 0
        %v354 = vsel %vm346, 1, 0
        %v355 = vsel %vm347, 1, 0
        %v356 = vsel %vm348, 1, 0
        %357 = vset.pattern.permute.xlu0 0
        %358 = vperm.xlu0 %357, %v349
        %v359 = vpop.permute.xlu0 %358
        %360 = vset.pattern.permute.xlu0 0
        %361 = vperm.xlu0 %360, %v350
        %v362 = vpop.permute.xlu0 %361
        %363 = vset.pattern.permute.xlu0 0
        %364 = vperm.xlu0 %363, %v351
        %v365 = vpop.permute.xlu0 %364
        %366 = vset.pattern.permute.xlu0 0
        %367 = vperm.xlu0 %366, %v352
        %v368 = vpop.permute.xlu0 %367
        %369 = vset.pattern.permute.xlu0 0
        %370 = vperm.xlu0 %369, %v353
        %v371 = vpop.permute.xlu0 %370
        %372 = vset.pattern.permute.xlu0 0
        %373 = vperm.xlu0 %372, %v354
        %v374 = vpop.permute.xlu0 %373
        %375 = vset.pattern.permute.xlu0 0
        %376 = vperm.xlu0 %375, %v355
        %v377 = vpop.permute.xlu0 %376
        %378 = vset.pattern.permute.xlu0 0
        %379 = vperm.xlu0 %378, %v356
        %v380 = vpop.permute.xlu0 %379
        %vm381 = vcmp.eq.s32.totalorder %v359, 1
        %vm382 = vcmp.eq.s32.totalorder %v362, 1
        %vm383 = vcmp.eq.s32.totalorder %v365, 1
        %vm384 = vcmp.eq.s32.totalorder %v368, 1
        %vm385 = vcmp.eq.s32.totalorder %v371, 1
        %vm386 = vcmp.eq.s32.totalorder %v374, 1
        %vm387 = vcmp.eq.s32.totalorder %v377, 1
        %vm388 = vcmp.eq.s32.totalorder %v380, 1
        %v389 = vsel %vm381, %v300, -1e+30
        %v390 = vsel %vm382, %v303, -1e+30
        %v391 = vsel %vm383, %v306, -1e+30
        %v392 = vsel %vm384, %v309, -1e+30
        %v393 = vsel %vm385, %v312, -1e+30
        %v394 = vsel %vm386, %v315, -1e+30
        %v395 = vsel %vm387, %v318, -1e+30
        %v396 = vsel %vm388, %v321, -1e+30
        %v397 = vrot.slane %v389, 4
        %v398 = vmax.f32 %v389, %v397
        %v399 = vrot.slane %v398, 2
        %v400 = vmax.f32 %v398, %v399
        %v401 = vrot.slane %v400, 1
        %v402 = vmax.f32 %v400, %v401
        %v403 = vrot.slane %v390, 4
        %v404 = vmax.f32 %v390, %v403
        %v405 = vrot.slane %v404, 2
        %v406 = vmax.f32 %v404, %v405
        %v407 = vrot.slane %v406, 1
        %v408 = vmax.f32 %v406, %v407
        %v409 = vrot.slane %v391, 4
        %v410 = vmax.f32 %v391, %v409
        %v411 = vrot.slane %v410, 2
        %v412 = vmax.f32 %v410, %v411
        %v413 = vrot.slane %v412, 1
        %v414 = vmax.f32 %v412, %v413
        %v415 = vrot.slane %v392, 4
        %v416 = vmax.f32 %v392, %v415
        %v417 = vrot.slane %v416, 2
        %v418 = vmax.f32 %v416, %v417
        %v419 = vrot.slane %v418, 1
        %v420 = vmax.f32 %v418, %v419
        %v421 = vrot.slane %v393, 4
        %v422 = vmax.f32 %v393, %v421
        %v423 = vrot.slane %v422, 2
        %v424 = vmax.f32 %v422, %v423
        %v425 = vrot.slane %v424, 1
        %v426 = vmax.f32 %v424, %v425
        %v427 = vrot.slane %v394, 4
        %v428 = vmax.f32 %v394, %v427
        %v429 = vrot.slane %v428, 2
        %v430 = vmax.f32 %v428, %v429
        %v431 = vrot.slane %v430, 1
        %v432 = vmax.f32 %v430, %v431
        %v433 = vrot.slane %v395, 4
        %v434 = vmax.f32 %v395, %v433
        %v435 = vrot.slane %v434, 2
        %v436 = vmax.f32 %v434, %v435
        %v437 = vrot.slane %v436, 1
        %v438 = vmax.f32 %v436, %v437
        %v439 = vrot.slane %v396, 4
        %v440 = vmax.f32 %v396, %v439
        %v441 = vrot.slane %v440, 2
        %v442 = vmax.f32 %v440, %v441
        %v443 = vrot.slane %v442, 1
        %v444 = vmax.f32 %v442, %v443
        %v445 = vsub.f32 %v300, %v402
        %v446 = vsub.f32 %v303, %v408
        %v447 = vsub.f32 %v306, %v414
        %v448 = vsub.f32 %v309, %v420
        %v449 = vsub.f32 %v312, %v426
        %v450 = vsub.f32 %v315, %v432
        %v451 = vsub.f32 %v318, %v438
        %v452 = vsub.f32 %v321, %v444
        %v453 = vmul.f32 %v445, 1.442695
        %v454 = vpow.pop %v453
        %v455 = vmul.f32 %v446, 1.442695
        %v456 = vpow.pop %v455
        %v457 = vmul.f32 %v447, 1.442695
        %v458 = vpow.pop %v457
        %v459 = vmul.f32 %v448, 1.442695
        %v460 = vpow.pop %v459
        %v461 = vmul.f32 %v449, 1.442695
        %v462 = vpow.pop %v461
        %v463 = vmul.f32 %v450, 1.442695
        %v464 = vpow.pop %v463
        %v465 = vmul.f32 %v451, 1.442695
        %v466 = vpow.pop %v465
        %v467 = vmul.f32 %v452, 1.442695
        %v468 = vpow.pop %v467
        %v469 = vsel %vm381, %v454, 0.0
        %v470 = vsel %vm382, %v456, 0.0
        %v471 = vsel %vm383, %v458, 0.0
        %v472 = vsel %vm384, %v460, 0.0
        %v473 = vsel %vm385, %v462, 0.0
        %v474 = vsel %vm386, %v464, 0.0
        %v475 = vsel %vm387, %v466, 0.0
        %v476 = vsel %vm388, %v468, 0.0
        %v477 = vrot.slane %v469, 4
        %v478 = vadd.f32 %v469, %v477
        %v479 = vrot.slane %v478, 2
        %v480 = vadd.f32 %v478, %v479
        %v481 = vrot.slane %v480, 1
        %v482 = vadd.f32 %v480, %v481
        %v483 = vrot.slane %v470, 4
        %v484 = vadd.f32 %v470, %v483
        %v485 = vrot.slane %v484, 2
        %v486 = vadd.f32 %v484, %v485
        %v487 = vrot.slane %v486, 1
        %v488 = vadd.f32 %v486, %v487
        %v489 = vrot.slane %v471, 4
        %v490 = vadd.f32 %v471, %v489
        %v491 = vrot.slane %v490, 2
        %v492 = vadd.f32 %v490, %v491
        %v493 = vrot.slane %v492, 1
        %v494 = vadd.f32 %v492, %v493
        %v495 = vrot.slane %v472, 4
        %v496 = vadd.f32 %v472, %v495
        %v497 = vrot.slane %v496, 2
        %v498 = vadd.f32 %v496, %v497
        %v499 = vrot.slane %v498, 1
        %v500 = vadd.f32 %v498, %v499
        %v501 = vrot.slane %v473, 4
        %v502 = vadd.f32 %v473, %v501
        %v503 = vrot.slane %v502, 2
        %v504 = vadd.f32 %v502, %v503
        %v505 = vrot.slane %v504, 1
        %v506 = vadd.f32 %v504, %v505
        %v507 = vrot.slane %v474, 4
        %v508 = vadd.f32 %v474, %v507
        %v509 = vrot.slane %v508, 2
        %v510 = vadd.f32 %v508, %v509
        %v511 = vrot.slane %v510, 1
        %v512 = vadd.f32 %v510, %v511
        %v513 = vrot.slane %v475, 4
        %v514 = vadd.f32 %v475, %v513
        %v515 = vrot.slane %v514, 2
        %v516 = vadd.f32 %v514, %v515
        %v517 = vrot.slane %v516, 1
        %v518 = vadd.f32 %v516, %v517
        %v519 = vrot.slane %v476, 4
        %v520 = vadd.f32 %v476, %v519
        %v521 = vrot.slane %v520, 2
        %v522 = vadd.f32 %v520, %v521
        %v523 = vrot.slane %v522, 1
        %v524 = vadd.f32 %v522, %v523
        %v525 = vmax.f32 %v482, 1e-30
        %v526 = vmax.f32 %v488, 1e-30
        %v527 = vmax.f32 %v494, 1e-30
        %v528 = vmax.f32 %v500, 1e-30
        %v529 = vmax.f32 %v506, 1e-30
        %v530 = vmax.f32 %v512, 1e-30
        %v531 = vmax.f32 %v518, 1e-30
        %v532 = vmax.f32 %v524, 1e-30
        %v533 = vrcp.pop %v525
        %v534 = vmul.f32 %v525, %v533
        %v535 = vsub.f32 1.0, %v534
        %v536 = vmul.f32 %v533, %v535
        %v537 = vadd.f32 %v533, %v536
        %vm538 = vweird.f32 %v525
        %vm539 = vweird.f32 %v533
        %vm540 = vmor %vm538, %vm539
        %v541 = vsel %vm540, %v533, %v537
        %v542 = vand.u32 2147483647, %v525
        %vm543 = vcmp.eq.f32.partialorder %v542, 8.507059e+37
        %v544 = vand.u32 %v525, 2147483648
        %v545 = vor.u32 1.1754944e-38, %v544
        %v546 = vsel %vm543, %v545, %v541
        %v547 = vrcp.pop %v526
        %v548 = vmul.f32 %v526, %v547
        %v549 = vsub.f32 1.0, %v548
        %v550 = vmul.f32 %v547, %v549
        %v551 = vadd.f32 %v547, %v550
        %vm552 = vweird.f32 %v526
        %vm553 = vweird.f32 %v547
        %vm554 = vmor %vm552, %vm553
        %v555 = vsel %vm554, %v547, %v551
        %v556 = vand.u32 2147483647, %v526
        %vm557 = vcmp.eq.f32.partialorder %v556, 8.507059e+37
        %v558 = vand.u32 %v526, 2147483648
        %v559 = vor.u32 1.1754944e-38, %v558
        %v560 = vsel %vm557, %v559, %v555
        %v561 = vrcp.pop %v527
        %v562 = vmul.f32 %v527, %v561
        %v563 = vsub.f32 1.0, %v562
        %v564 = vmul.f32 %v561, %v563
        %v565 = vadd.f32 %v561, %v564
        %vm566 = vweird.f32 %v527
        %vm567 = vweird.f32 %v561
        %vm568 = vmor %vm566, %vm567
        %v569 = vsel %vm568, %v561, %v565
        %v570 = vand.u32 2147483647, %v527
        %vm571 = vcmp.eq.f32.partialorder %v570, 8.507059e+37
        %v572 = vand.u32 %v527, 2147483648
        %v573 = vor.u32 1.1754944e-38, %v572
        %v574 = vsel %vm571, %v573, %v569
        %v575 = vrcp.pop %v528
        %v576 = vmul.f32 %v528, %v575
        %v577 = vsub.f32 1.0, %v576
        %v578 = vmul.f32 %v575, %v577
        %v579 = vadd.f32 %v575, %v578
        %vm580 = vweird.f32 %v528
        %vm581 = vweird.f32 %v575
        %vm582 = vmor %vm580, %vm581
        %v583 = vsel %vm582, %v575, %v579
        %v584 = vand.u32 2147483647, %v528
        %vm585 = vcmp.eq.f32.partialorder %v584, 8.507059e+37
        %v586 = vand.u32 %v528, 2147483648
        %v587 = vor.u32 1.1754944e-38, %v586
        %v588 = vsel %vm585, %v587, %v583
        %v589 = vrcp.pop %v529
        %v590 = vmul.f32 %v529, %v589
        %v591 = vsub.f32 1.0, %v590
        %v592 = vmul.f32 %v589, %v591
        %v593 = vadd.f32 %v589, %v592
        %vm594 = vweird.f32 %v529
        %vm595 = vweird.f32 %v589
        %vm596 = vmor %vm594, %vm595
        %v597 = vsel %vm596, %v589, %v593
        %v598 = vand.u32 2147483647, %v529
        %vm599 = vcmp.eq.f32.partialorder %v598, 8.507059e+37
        %v600 = vand.u32 %v529, 2147483648
        %v601 = vor.u32 1.1754944e-38, %v600
        %v602 = vsel %vm599, %v601, %v597
        %v603 = vrcp.pop %v530
        %v604 = vmul.f32 %v530, %v603
        %v605 = vsub.f32 1.0, %v604
        %v606 = vmul.f32 %v603, %v605
        %v607 = vadd.f32 %v603, %v606
        %vm608 = vweird.f32 %v530
        %vm609 = vweird.f32 %v603
        %vm610 = vmor %vm608, %vm609
        %v611 = vsel %vm610, %v603, %v607
        %v612 = vand.u32 2147483647, %v530
        %vm613 = vcmp.eq.f32.partialorder %v612, 8.507059e+37
        %v614 = vand.u32 %v530, 2147483648
        %v615 = vor.u32 1.1754944e-38, %v614
        %v616 = vsel %vm613, %v615, %v611
        %v617 = vrcp.pop %v531
        %v618 = vmul.f32 %v531, %v617
        %v619 = vsub.f32 1.0, %v618
        %v620 = vmul.f32 %v617, %v619
        %v621 = vadd.f32 %v617, %v620
        %vm622 = vweird.f32 %v531
        %vm623 = vweird.f32 %v617
        %vm624 = vmor %vm622, %vm623
        %v625 = vsel %vm624, %v617, %v621
        %v626 = vand.u32 2147483647, %v531
        %vm627 = vcmp.eq.f32.partialorder %v626, 8.507059e+37
        %v628 = vand.u32 %v531, 2147483648
        %v629 = vor.u32 1.1754944e-38, %v628
        %v630 = vsel %vm627, %v629, %v625
        %v631 = vrcp.pop %v532
        %v632 = vmul.f32 %v532, %v631
        %v633 = vsub.f32 1.0, %v632
        %v634 = vmul.f32 %v631, %v633
        %v635 = vadd.f32 %v631, %v634
        %vm636 = vweird.f32 %v532
        %vm637 = vweird.f32 %v631
        %vm638 = vmor %vm636, %vm637
        %v639 = vsel %vm638, %v631, %v635
        %v640 = vand.u32 2147483647, %v532
        %vm641 = vcmp.eq.f32.partialorder %v640, 8.507059e+37
        %v642 = vand.u32 %v532, 2147483648
        %v643 = vor.u32 1.1754944e-38, %v642
        %v644 = vsel %vm641, %v643, %v639
        %v645 = vmul.f32 %v469, %v546
        %v646 = vmul.f32 %v470, %v560
        %v647 = vmul.f32 %v471, %v574
        %v648 = vmul.f32 %v472, %v588
        %v649 = vmul.f32 %v473, %v602
        %v650 = vmul.f32 %v474, %v616
        %v651 = vmul.f32 %v475, %v630
        %v652 = vmul.f32 %v476, %v644
        %653 = vxpose.xlu0.b32.start [1/16] %v645, 128
        %654 = vxpose.xlu0.b32.cont [2/16] 0.0, 128
        %655 = vxpose.xlu0.b32.cont [3/16] 0.0, 128
        %656 = vxpose.xlu0.b32.cont [4/16] 0.0, 128
        %657 = vxpose.xlu0.b32.cont [5/16] 0.0, 128
        %658 = vxpose.xlu0.b32.cont [6/16] 0.0, 128
        %659 = vxpose.xlu0.b32.cont [7/16] 0.0, 128
        %660 = vxpose.xlu0.b32.cont [8/16] 0.0, 128
        %661 = vxpose.xlu0.b32.cont [9/16] 0.0, 128
        %662 = vxpose.xlu0.b32.cont [10/16] 0.0, 128
        %663 = vxpose.xlu0.b32.cont [11/16] 0.0, 128
        %664 = vxpose.xlu0.b32.cont [12/16] 0.0, 128
        %665 = vxpose.xlu0.b32.cont [13/16] 0.0, 128
        %666 = vxpose.xlu0.b32.cont [14/16] 0.0, 128
        %667 = vxpose.xlu0.b32.cont [15/16] 0.0, 128
        %668 = vxpose.xlu0.b32.end [16/16] 0.0, 128
        %v669 = vpop.trf.xlu0
        %v670 = vpop.trf.xlu0
        %v671 = vpop.trf.xlu0
        %v672 = vpop.trf.xlu0
        %v673 = vpop.trf.xlu0
        %v674 = vpop.trf.xlu0
        %v675 = vpop.trf.xlu0
        %v676 = vpop.trf.xlu0
        %v677 = vpop.trf.xlu0
        %v678 = vpop.trf.xlu0
        %v679 = vpop.trf.xlu0
        %v680 = vpop.trf.xlu0
        %v681 = vpop.trf.xlu0
        %v682 = vpop.trf.xlu0
        %v683 = vpop.trf.xlu0
        %v684 = vpop.trf.xlu0
        %vm685 = vcmask 64512
        %v687 = vsel %vm685, %v669, 0
        %v690 = vsel %vm685, %v670, 0
        %v693 = vsel %vm685, %v671, 0
        %v696 = vsel %vm685, %v672, 0
        %v699 = vsel %vm685, %v673, 0
        %v702 = vsel %vm685, %v674, 0
        %v705 = vsel %vm685, %v675, 0
        %v708 = vsel %vm685, %v676, 0
        %v711 = vsel %vm685, %v677, 0
        %v714 = vsel %vm685, %v678, 0
        %v717 = vsel %vm685, %v679, 0
        %v720 = vsel %vm685, %v680, 0
        %v723 = vsel %vm685, %v681, 0
        %v726 = vsel %vm685, %v682, 0
        %v729 = vsel %vm685, %v683, 0
        %v732 = vsel %vm685, %v684, 0
        %734 = vmatpush.msra.mxu0 0.0
        %735 = vmatpush.msra.mxu0 0.0
        %736 = vmatpush.msra.mxu0 0.0
        %737 = vmatpush.msra.mxu0 0.0
        %738 = vmatpush.msra.mxu0 0.0
        %739 = vmatpush.msra.mxu0 0.0
        %740 = vmatpush.msra.mxu0 0.0
        %741 = vmatpush.msra.mxu0 0.0
        %742 = vmatpush.msra.mxu0 0.0
        %743 = vmatpush.msra.mxu0 0.0
        %744 = vmatpush.msra.mxu0 0.0
        %745 = vmatpush.msra.mxu0 0.0
        %746 = vmatpush.msra.mxu0 0.0
        %747 = vmatpush.msra.mxu0 0.0
        %748 = vmatpush.msra.mxu0 0.0
        %749 = vmatpush.msra.mxu0 %v254
        %750 = vmatmul.f32.gmra.mxu0 %v687
        %v751 = vpop.f32.mrf.mxu0
        %v752 = vadd.f32 0.0, %v751
        %753 = vmatmul.f32.gmra.mxu0 %v690
        %v754 = vpop.f32.mrf.mxu0
        %v755 = vadd.f32 0.0, %v754
        %756 = vmatmul.f32.gmra.mxu0 %v693
        %v757 = vpop.f32.mrf.mxu0
        %v758 = vadd.f32 0.0, %v757
        %759 = vmatmul.f32.gmra.mxu0 %v696
        %v760 = vpop.f32.mrf.mxu0
        %v761 = vadd.f32 0.0, %v760
        %762 = vmatmul.f32.gmra.mxu0 %v699
        %v763 = vpop.f32.mrf.mxu0
        %v764 = vadd.f32 0.0, %v763
        %765 = vmatmul.f32.gmra.mxu0 %v702
        %v766 = vpop.f32.mrf.mxu0
        %v767 = vadd.f32 0.0, %v766
        %768 = vmatmul.f32.gmra.mxu0 %v705
        %v769 = vpop.f32.mrf.mxu0
        %v770 = vadd.f32 0.0, %v769
        %771 = vmatmul.f32.gmra.mxu0 %v708
        %v772 = vpop.f32.mrf.mxu0
        %v773 = vadd.f32 0.0, %v772
        %774 = vmatmul.f32.gmra.mxu0 %v711
        %v775 = vpop.f32.mrf.mxu0
        %v776 = vadd.f32 0.0, %v775
        %777 = vmatmul.f32.gmra.mxu0 %v714
        %v778 = vpop.f32.mrf.mxu0
        %v779 = vadd.f32 0.0, %v778
        %780 = vmatmul.f32.gmra.mxu0 %v717
        %v781 = vpop.f32.mrf.mxu0
        %v782 = vadd.f32 0.0, %v781
        %783 = vmatmul.f32.gmra.mxu0 %v720
        %v784 = vpop.f32.mrf.mxu0
        %v785 = vadd.f32 0.0, %v784
        %786 = vmatmul.f32.gmra.mxu0 %v723
        %v787 = vpop.f32.mrf.mxu0
        %v788 = vadd.f32 0.0, %v787
        %789 = vmatmul.f32.gmra.mxu0 %v726
        %v790 = vpop.f32.mrf.mxu0
        %v791 = vadd.f32 0.0, %v790
        %792 = vmatmul.f32.gmra.mxu0 %v729
        %v793 = vpop.f32.mrf.mxu0
        %v794 = vadd.f32 0.0, %v793
        %795 = vmatmul.f32.gmra.mxu0 %v732
        %v796 = vpop.f32.mrf.mxu0
        %v797 = vadd.f32 0.0, %v796
        %798 = vdwg.mxu0
        %799 = vxpose.xlu0.b32.start [1/16] %v646, 128
        %800 = vxpose.xlu0.b32.cont [2/16] 0.0, 128
        %801 = vxpose.xlu0.b32.cont [3/16] 0.0, 128
        %802 = vxpose.xlu0.b32.cont [4/16] 0.0, 128
        %803 = vxpose.xlu0.b32.cont [5/16] 0.0, 128
        %804 = vxpose.xlu0.b32.cont [6/16] 0.0, 128
        %805 = vxpose.xlu0.b32.cont [7/16] 0.0, 128
        %806 = vxpose.xlu0.b32.cont [8/16] 0.0, 128
        %807 = vxpose.xlu0.b32.cont [9/16] 0.0, 128
        %808 = vxpose.xlu0.b32.cont [10/16] 0.0, 128
        %809 = vxpose.xlu0.b32.cont [11/16] 0.0, 128
        %810 = vxpose.xlu0.b32.cont [12/16] 0.0, 128
        %811 = vxpose.xlu0.b32.cont [13/16] 0.0, 128
        %812 = vxpose.xlu0.b32.cont [14/16] 0.0, 128
        %813 = vxpose.xlu0.b32.cont [15/16] 0.0, 128
        %814 = vxpose.xlu0.b32.end [16/16] 0.0, 128
        %v815 = vpop.trf.xlu0
        %v816 = vpop.trf.xlu0
        %v817 = vpop.trf.xlu0
        %v818 = vpop.trf.xlu0
        %v819 = vpop.trf.xlu0
        %v820 = vpop.trf.xlu0
        %v821 = vpop.trf.xlu0
        %v822 = vpop.trf.xlu0
        %v823 = vpop.trf.xlu0
        %v824 = vpop.trf.xlu0
        %v825 = vpop.trf.xlu0
        %v826 = vpop.trf.xlu0
        %v827 = vpop.trf.xlu0
        %v828 = vpop.trf.xlu0
        %v829 = vpop.trf.xlu0
        %v830 = vpop.trf.xlu0
        %v832 = vsel %vm685, %v815, 0
        %v835 = vsel %vm685, %v816, 0
        %v838 = vsel %vm685, %v817, 0
        %v841 = vsel %vm685, %v818, 0
        %v844 = vsel %vm685, %v819, 0
        %v847 = vsel %vm685, %v820, 0
        %v850 = vsel %vm685, %v821, 0
        %v853 = vsel %vm685, %v822, 0
        %v856 = vsel %vm685, %v823, 0
        %v859 = vsel %vm685, %v824, 0
        %v862 = vsel %vm685, %v825, 0
        %v865 = vsel %vm685, %v826, 0
        %v868 = vsel %vm685, %v827, 0
        %v871 = vsel %vm685, %v828, 0
        %v874 = vsel %vm685, %v829, 0
        %v877 = vsel %vm685, %v830, 0
        %879 = vmatpush.msra.mxu0 0.0
        %880 = vmatpush.msra.mxu0 0.0
        %881 = vmatpush.msra.mxu0 0.0
        %882 = vmatpush.msra.mxu0 0.0
        %883 = vmatpush.msra.mxu0 0.0
        %884 = vmatpush.msra.mxu0 0.0
        %885 = vmatpush.msra.mxu0 0.0
        %886 = vmatpush.msra.mxu0 0.0
        %887 = vmatpush.msra.mxu0 0.0
        %888 = vmatpush.msra.mxu0 0.0
        %889 = vmatpush.msra.mxu0 0.0
        %890 = vmatpush.msra.mxu0 0.0
        %891 = vmatpush.msra.mxu0 0.0
        %892 = vmatpush.msra.mxu0 0.0
        %893 = vmatpush.msra.mxu0 0.0
        %894 = vmatpush.msra.mxu0 %v255
        %895 = vmatmul.f32.gmra.mxu0 %v832
        %v896 = vpop.f32.mrf.mxu0
        %v897 = vadd.f32 0.0, %v896
        %898 = vmatmul.f32.gmra.mxu0 %v835
        %v899 = vpop.f32.mrf.mxu0
        %v900 = vadd.f32 0.0, %v899
        %901 = vmatmul.f32.gmra.mxu0 %v838
        %v902 = vpop.f32.mrf.mxu0
        %v903 = vadd.f32 0.0, %v902
        %904 = vmatmul.f32.gmra.mxu0 %v841
        %v905 = vpop.f32.mrf.mxu0
        %v906 = vadd.f32 0.0, %v905
        %907 = vmatmul.f32.gmra.mxu0 %v844
        %v908 = vpop.f32.mrf.mxu0
        %v909 = vadd.f32 0.0, %v908
        %910 = vmatmul.f32.gmra.mxu0 %v847
        %v911 = vpop.f32.mrf.mxu0
        %v912 = vadd.f32 0.0, %v911
        %913 = vmatmul.f32.gmra.mxu0 %v850
        %v914 = vpop.f32.mrf.mxu0
        %v915 = vadd.f32 0.0, %v914
        %916 = vmatmul.f32.gmra.mxu0 %v853
        %v917 = vpop.f32.mrf.mxu0
        %v918 = vadd.f32 0.0, %v917
        %919 = vmatmul.f32.gmra.mxu0 %v856
        %v920 = vpop.f32.mrf.mxu0
        %v921 = vadd.f32 0.0, %v920
        %922 = vmatmul.f32.gmra.mxu0 %v859
        %v923 = vpop.f32.mrf.mxu0
        %v924 = vadd.f32 0.0, %v923
        %925 = vmatmul.f32.gmra.mxu0 %v862
        %v926 = vpop.f32.mrf.mxu0
        %v927 = vadd.f32 0.0, %v926
        %928 = vmatmul.f32.gmra.mxu0 %v865
        %v929 = vpop.f32.mrf.mxu0
        %v930 = vadd.f32 0.0, %v929
        %931 = vmatmul.f32.gmra.mxu0 %v868
        %v932 = vpop.f32.mrf.mxu0
        %v933 = vadd.f32 0.0, %v932
        %934 = vmatmul.f32.gmra.mxu0 %v871
        %v935 = vpop.f32.mrf.mxu0
        %v936 = vadd.f32 0.0, %v935
        %937 = vmatmul.f32.gmra.mxu0 %v874
        %v938 = vpop.f32.mrf.mxu0
        %v939 = vadd.f32 0.0, %v938
        %940 = vmatmul.f32.gmra.mxu0 %v877
        %v941 = vpop.f32.mrf.mxu0
        %v942 = vadd.f32 0.0, %v941
        %943 = vdwg.mxu0
        %944 = vxpose.xlu0.b32.start [1/16] %v647, 128
        %945 = vxpose.xlu0.b32.cont [2/16] 0.0, 128
        %946 = vxpose.xlu0.b32.cont [3/16] 0.0, 128
        %947 = vxpose.xlu0.b32.cont [4/16] 0.0, 128
        %948 = vxpose.xlu0.b32.cont [5/16] 0.0, 128
        %949 = vxpose.xlu0.b32.cont [6/16] 0.0, 128
        %950 = vxpose.xlu0.b32.cont [7/16] 0.0, 128
        %951 = vxpose.xlu0.b32.cont [8/16] 0.0, 128
        %952 = vxpose.xlu0.b32.cont [9/16] 0.0, 128
        %953 = vxpose.xlu0.b32.cont [10/16] 0.0, 128
        %954 = vxpose.xlu0.b32.cont [11/16] 0.0, 128
        %955 = vxpose.xlu0.b32.cont [12/16] 0.0, 128
        %956 = vxpose.xlu0.b32.cont [13/16] 0.0, 128
        %957 = vxpose.xlu0.b32.cont [14/16] 0.0, 128
        %958 = vxpose.xlu0.b32.cont [15/16] 0.0, 128
        %959 = vxpose.xlu0.b32.end [16/16] 0.0, 128
        %v960 = vpop.trf.xlu0
        %v961 = vpop.trf.xlu0
        %v962 = vpop.trf.xlu0
        %v963 = vpop.trf.xlu0
        %v964 = vpop.trf.xlu0
        %v965 = vpop.trf.xlu0
        %v966 = vpop.trf.xlu0
        %v967 = vpop.trf.xlu0
        %v968 = vpop.trf.xlu0
        %v969 = vpop.trf.xlu0
        %v970 = vpop.trf.xlu0
        %v971 = vpop.trf.xlu0
        %v972 = vpop.trf.xlu0
        %v973 = vpop.trf.xlu0
        %v974 = vpop.trf.xlu0
        %v975 = vpop.trf.xlu0
        %v977 = vsel %vm685, %v960, 0
        %v980 = vsel %vm685, %v961, 0
        %v983 = vsel %vm685, %v962, 0
        %v986 = vsel %vm685, %v963, 0
        %v989 = vsel %vm685, %v964, 0
        %v992 = vsel %vm685, %v965, 0
        %v995 = vsel %vm685, %v966, 0
        %v998 = vsel %vm685, %v967, 0
        %v1001 = vsel %vm685, %v968, 0
        %v1004 = vsel %vm685, %v969, 0
        %v1007 = vsel %vm685, %v970, 0
        %v1010 = vsel %vm685, %v971, 0
        %v1013 = vsel %vm685, %v972, 0
        %v1016 = vsel %vm685, %v973, 0
        %v1019 = vsel %vm685, %v974, 0
        %v1022 = vsel %vm685, %v975, 0
        %1024 = vmatpush.msra.mxu0 0.0
        %1025 = vmatpush.msra.mxu0 0.0
        %1026 = vmatpush.msra.mxu0 0.0
        %1027 = vmatpush.msra.mxu0 0.0
        %1028 = vmatpush.msra.mxu0 0.0
        %1029 = vmatpush.msra.mxu0 0.0
        %1030 = vmatpush.msra.mxu0 0.0
        %1031 = vmatpush.msra.mxu0 0.0
        %1032 = vmatpush.msra.mxu0 0.0
        %1033 = vmatpush.msra.mxu0 0.0
        %1034 = vmatpush.msra.mxu0 0.0
        %1035 = vmatpush.msra.mxu0 0.0
        %1036 = vmatpush.msra.mxu0 0.0
        %1037 = vmatpush.msra.mxu0 0.0
        %1038 = vmatpush.msra.mxu0 0.0
        %1039 = vmatpush.msra.mxu0 %v256
        %1040 = vmatmul.f32.gmra.mxu0 %v977
        %v1041 = vpop.f32.mrf.mxu0
        %v1042 = vadd.f32 0.0, %v1041
        %1043 = vmatmul.f32.gmra.mxu0 %v980
        %v1044 = vpop.f32.mrf.mxu0
        %v1045 = vadd.f32 0.0, %v1044
        %1046 = vmatmul.f32.gmra.mxu0 %v983
        %v1047 = vpop.f32.mrf.mxu0
        %v1048 = vadd.f32 0.0, %v1047
        %1049 = vmatmul.f32.gmra.mxu0 %v986
        %v1050 = vpop.f32.mrf.mxu0
        %v1051 = vadd.f32 0.0, %v1050
        %1052 = vmatmul.f32.gmra.mxu0 %v989
        %v1053 = vpop.f32.mrf.mxu0
        %v1054 = vadd.f32 0.0, %v1053
        %1055 = vmatmul.f32.gmra.mxu0 %v992
        %v1056 = vpop.f32.mrf.mxu0
        %v1057 = vadd.f32 0.0, %v1056
        %1058 = vmatmul.f32.gmra.mxu0 %v995
        %v1059 = vpop.f32.mrf.mxu0
        %v1060 = vadd.f32 0.0, %v1059
        %1061 = vmatmul.f32.gmra.mxu0 %v998
        %v1062 = vpop.f32.mrf.mxu0
        %v1063 = vadd.f32 0.0, %v1062
        %1064 = vmatmul.f32.gmra.mxu0 %v1001
        %v1065 = vpop.f32.mrf.mxu0
        %v1066 = vadd.f32 0.0, %v1065
        %1067 = vmatmul.f32.gmra.mxu0 %v1004
        %v1068 = vpop.f32.mrf.mxu0
        %v1069 = vadd.f32 0.0, %v1068
        %1070 = vmatmul.f32.gmra.mxu0 %v1007
        %v1071 = vpop.f32.mrf.mxu0
        %v1072 = vadd.f32 0.0, %v1071
        %1073 = vmatmul.f32.gmra.mxu0 %v1010
        %v1074 = vpop.f32.mrf.mxu0
        %v1075 = vadd.f32 0.0, %v1074
        %1076 = vmatmul.f32.gmra.mxu0 %v1013
        %v1077 = vpop.f32.mrf.mxu0
        %v1078 = vadd.f32 0.0, %v1077
        %1079 = vmatmul.f32.gmra.mxu0 %v1016
        %v1080 = vpop.f32.mrf.mxu0
        %v1081 = vadd.f32 0.0, %v1080
        %1082 = vmatmul.f32.gmra.mxu0 %v1019
        %v1083 = vpop.f32.mrf.mxu0
        %v1084 = vadd.f32 0.0, %v1083
        %1085 = vmatmul.f32.gmra.mxu0 %v1022
        %v1086 = vpop.f32.mrf.mxu0
        %v1087 = vadd.f32 0.0, %v1086
        %1088 = vdwg.mxu0
        %1089 = vxpose.xlu0.b32.start [1/16] %v648, 128
        %1090 = vxpose.xlu0.b32.cont [2/16] 0.0, 128
        %1091 = vxpose.xlu0.b32.cont [3/16] 0.0, 128
        %1092 = vxpose.xlu0.b32.cont [4/16] 0.0, 128
        %1093 = vxpose.xlu0.b32.cont [5/16] 0.0, 128
        %1094 = vxpose.xlu0.b32.cont [6/16] 0.0, 128
        %1095 = vxpose.xlu0.b32.cont [7/16] 0.0, 128
        %1096 = vxpose.xlu0.b32.cont [8/16] 0.0, 128
        %1097 = vxpose.xlu0.b32.cont [9/16] 0.0, 128
        %1098 = vxpose.xlu0.b32.cont [10/16] 0.0, 128
        %1099 = vxpose.xlu0.b32.cont [11/16] 0.0, 128
        %1100 = vxpose.xlu0.b32.cont [12/16] 0.0, 128
        %1101 = vxpose.xlu0.b32.cont [13/16] 0.0, 128
        %1102 = vxpose.xlu0.b32.cont [14/16] 0.0, 128
        %1103 = vxpose.xlu0.b32.cont [15/16] 0.0, 128
        %1104 = vxpose.xlu0.b32.end [16/16] 0.0, 128
        %v1105 = vpop.trf.xlu0
        %v1106 = vpop.trf.xlu0
        %v1107 = vpop.trf.xlu0
        %v1108 = vpop.trf.xlu0
        %v1109 = vpop.trf.xlu0
        %v1110 = vpop.trf.xlu0
        %v1111 = vpop.trf.xlu0
        %v1112 = vpop.trf.xlu0
        %v1113 = vpop.trf.xlu0
        %v1114 = vpop.trf.xlu0
        %v1115 = vpop.trf.xlu0
        %v1116 = vpop.trf.xlu0
        %v1117 = vpop.trf.xlu0
        %v1118 = vpop.trf.xlu0
        %v1119 = vpop.trf.xlu0
        %v1120 = vpop.trf.xlu0
        %v1122 = vsel %vm685, %v1105, 0
        %v1125 = vsel %vm685, %v1106, 0
        %v1128 = vsel %vm685, %v1107, 0
        %v1131 = vsel %vm685, %v1108, 0
        %v1134 = vsel %vm685, %v1109, 0
        %v1137 = vsel %vm685, %v1110, 0
        %v1140 = vsel %vm685, %v1111, 0
        %v1143 = vsel %vm685, %v1112, 0
        %v1146 = vsel %vm685, %v1113, 0
        %v1149 = vsel %vm685, %v1114, 0
        %v1152 = vsel %vm685, %v1115, 0
        %v1155 = vsel %vm685, %v1116, 0
        %v1158 = vsel %vm685, %v1117, 0
        %v1161 = vsel %vm685, %v1118, 0
        %v1164 = vsel %vm685, %v1119, 0
        %v1167 = vsel %vm685, %v1120, 0
        %1169 = vmatpush.msra.mxu0 0.0
        %1170 = vmatpush.msra.mxu0 0.0
        %1171 = vmatpush.msra.mxu0 0.0
        %1172 = vmatpush.msra.mxu0 0.0
        %1173 = vmatpush.msra.mxu0 0.0
        %1174 = vmatpush.msra.mxu0 0.0
        %1175 = vmatpush.msra.mxu0 0.0
        %1176 = vmatpush.msra.mxu0 0.0
        %1177 = vmatpush.msra.mxu0 0.0
        %1178 = vmatpush.msra.mxu0 0.0
        %1179 = vmatpush.msra.mxu0 0.0
        %1180 = vmatpush.msra.mxu0 0.0
        %1181 = vmatpush.msra.mxu0 0.0
        %1182 = vmatpush.msra.mxu0 0.0
        %1183 = vmatpush.msra.mxu0 0.0
        %1184 = vmatpush.msra.mxu0 %v257
        %1185 = vmatmul.f32.gmra.mxu0 %v1122
        %v1186 = vpop.f32.mrf.mxu0
        %v1187 = vadd.f32 0.0, %v1186
        %1188 = vmatmul.f32.gmra.mxu0 %v1125
        %v1189 = vpop.f32.mrf.mxu0
        %v1190 = vadd.f32 0.0, %v1189
        %1191 = vmatmul.f32.gmra.mxu0 %v1128
        %v1192 = vpop.f32.mrf.mxu0
        %v1193 = vadd.f32 0.0, %v1192
        %1194 = vmatmul.f32.gmra.mxu0 %v1131
        %v1195 = vpop.f32.mrf.mxu0
        %v1196 = vadd.f32 0.0, %v1195
        %1197 = vmatmul.f32.gmra.mxu0 %v1134
        %v1198 = vpop.f32.mrf.mxu0
        %v1199 = vadd.f32 0.0, %v1198
        %1200 = vmatmul.f32.gmra.mxu0 %v1137
        %v1201 = vpop.f32.mrf.mxu0
        %v1202 = vadd.f32 0.0, %v1201
        %1203 = vmatmul.f32.gmra.mxu0 %v1140
        %v1204 = vpop.f32.mrf.mxu0
        %v1205 = vadd.f32 0.0, %v1204
        %1206 = vmatmul.f32.gmra.mxu0 %v1143
        %v1207 = vpop.f32.mrf.mxu0
        %v1208 = vadd.f32 0.0, %v1207
        %1209 = vmatmul.f32.gmra.mxu0 %v1146
        %v1210 = vpop.f32.mrf.mxu0
        %v1211 = vadd.f32 0.0, %v1210
        %1212 = vmatmul.f32.gmra.mxu0 %v1149
        %v1213 = vpop.f32.mrf.mxu0
        %v1214 = vadd.f32 0.0, %v1213
        %1215 = vmatmul.f32.gmra.mxu0 %v1152
        %v1216 = vpop.f32.mrf.mxu0
        %v1217 = vadd.f32 0.0, %v1216
        %1218 = vmatmul.f32.gmra.mxu0 %v1155
        %v1219 = vpop.f32.mrf.mxu0
        %v1220 = vadd.f32 0.0, %v1219
        %1221 = vmatmul.f32.gmra.mxu0 %v1158
        %v1222 = vpop.f32.mrf.mxu0
        %v1223 = vadd.f32 0.0, %v1222
        %1224 = vmatmul.f32.gmra.mxu0 %v1161
        %v1225 = vpop.f32.mrf.mxu0
        %v1226 = vadd.f32 0.0, %v1225
        %1227 = vmatmul.f32.gmra.mxu0 %v1164
        %v1228 = vpop.f32.mrf.mxu0
        %v1229 = vadd.f32 0.0, %v1228
        %1230 = vmatmul.f32.gmra.mxu0 %v1167
        %v1231 = vpop.f32.mrf.mxu0
        %v1232 = vadd.f32 0.0, %v1231
        %1233 = vdwg.mxu0
        %1234 = vxpose.xlu0.b32.start [1/16] %v649, 128
        %1235 = vxpose.xlu0.b32.cont [2/16] 0.0, 128
        %1236 = vxpose.xlu0.b32.cont [3/16] 0.0, 128
        %1237 = vxpose.xlu0.b32.cont [4/16] 0.0, 128
        %1238 = vxpose.xlu0.b32.cont [5/16] 0.0, 128
        %1239 = vxpose.xlu0.b32.cont [6/16] 0.0, 128
        %1240 = vxpose.xlu0.b32.cont [7/16] 0.0, 128
        %1241 = vxpose.xlu0.b32.cont [8/16] 0.0, 128
        %1242 = vxpose.xlu0.b32.cont [9/16] 0.0, 128
        %1243 = vxpose.xlu0.b32.cont [10/16] 0.0, 128
        %1244 = vxpose.xlu0.b32.cont [11/16] 0.0, 128
        %1245 = vxpose.xlu0.b32.cont [12/16] 0.0, 128
        %1246 = vxpose.xlu0.b32.cont [13/16] 0.0, 128
        %1247 = vxpose.xlu0.b32.cont [14/16] 0.0, 128
        %1248 = vxpose.xlu0.b32.cont [15/16] 0.0, 128
        %1249 = vxpose.xlu0.b32.end [16/16] 0.0, 128
        %v1250 = vpop.trf.xlu0
        %v1251 = vpop.trf.xlu0
        %v1252 = vpop.trf.xlu0
        %v1253 = vpop.trf.xlu0
        %v1254 = vpop.trf.xlu0
        %v1255 = vpop.trf.xlu0
        %v1256 = vpop.trf.xlu0
        %v1257 = vpop.trf.xlu0
        %v1258 = vpop.trf.xlu0
        %v1259 = vpop.trf.xlu0
        %v1260 = vpop.trf.xlu0
        %v1261 = vpop.trf.xlu0
        %v1262 = vpop.trf.xlu0
        %v1263 = vpop.trf.xlu0
        %v1264 = vpop.trf.xlu0
        %v1265 = vpop.trf.xlu0
        %v1267 = vsel %vm685, %v1250, 0
        %v1270 = vsel %vm685, %v1251, 0
        %v1273 = vsel %vm685, %v1252, 0
        %v1276 = vsel %vm685, %v1253, 0
        %v1279 = vsel %vm685, %v1254, 0
        %v1282 = vsel %vm685, %v1255, 0
        %v1285 = vsel %vm685, %v1256, 0
        %v1288 = vsel %vm685, %v1257, 0
        %v1291 = vsel %vm685, %v1258, 0
        %v1294 = vsel %vm685, %v1259, 0
        %v1297 = vsel %vm685, %v1260, 0
        %v1300 = vsel %vm685, %v1261, 0
        %v1303 = vsel %vm685, %v1262, 0
        %v1306 = vsel %vm685, %v1263, 0
        %v1309 = vsel %vm685, %v1264, 0
        %v1312 = vsel %vm685, %v1265, 0
        %1314 = vmatpush.msra.mxu0 0.0
        %1315 = vmatpush.msra.mxu0 0.0
        %1316 = vmatpush.msra.mxu0 0.0
        %1317 = vmatpush.msra.mxu0 0.0
        %1318 = vmatpush.msra.mxu0 0.0
        %1319 = vmatpush.msra.mxu0 0.0
        %1320 = vmatpush.msra.mxu0 0.0
        %1321 = vmatpush.msra.mxu0 0.0
        %1322 = vmatpush.msra.mxu0 0.0
        %1323 = vmatpush.msra.mxu0 0.0
        %1324 = vmatpush.msra.mxu0 0.0
        %1325 = vmatpush.msra.mxu0 0.0
        %1326 = vmatpush.msra.mxu0 0.0
        %1327 = vmatpush.msra.mxu0 0.0
        %1328 = vmatpush.msra.mxu0 0.0
        %1329 = vmatpush.msra.mxu0 %v258
        %1330 = vmatmul.f32.gmra.mxu0 %v1267
        %v1331 = vpop.f32.mrf.mxu0
        %v1332 = vadd.f32 0.0, %v1331
        %1333 = vmatmul.f32.gmra.mxu0 %v1270
        %v1334 = vpop.f32.mrf.mxu0
        %v1335 = vadd.f32 0.0, %v1334
        %1336 = vmatmul.f32.gmra.mxu0 %v1273
        %v1337 = vpop.f32.mrf.mxu0
        %v1338 = vadd.f32 0.0, %v1337
        %1339 = vmatmul.f32.gmra.mxu0 %v1276
        %v1340 = vpop.f32.mrf.mxu0
        %v1341 = vadd.f32 0.0, %v1340
        %1342 = vmatmul.f32.gmra.mxu0 %v1279
        %v1343 = vpop.f32.mrf.mxu0
        %v1344 = vadd.f32 0.0, %v1343
        %1345 = vmatmul.f32.gmra.mxu0 %v1282
        %v1346 = vpop.f32.mrf.mxu0
        %v1347 = vadd.f32 0.0, %v1346
        %1348 = vmatmul.f32.gmra.mxu0 %v1285
        %v1349 = vpop.f32.mrf.mxu0
        %v1350 = vadd.f32 0.0, %v1349
        %1351 = vmatmul.f32.gmra.mxu0 %v1288
        %v1352 = vpop.f32.mrf.mxu0
        %v1353 = vadd.f32 0.0, %v1352
        %1354 = vmatmul.f32.gmra.mxu0 %v1291
        %v1355 = vpop.f32.mrf.mxu0
        %v1356 = vadd.f32 0.0, %v1355
        %1357 = vmatmul.f32.gmra.mxu0 %v1294
        %v1358 = vpop.f32.mrf.mxu0
        %v1359 = vadd.f32 0.0, %v1358
        %1360 = vmatmul.f32.gmra.mxu0 %v1297
        %v1361 = vpop.f32.mrf.mxu0
        %v1362 = vadd.f32 0.0, %v1361
        %1363 = vmatmul.f32.gmra.mxu0 %v1300
        %v1364 = vpop.f32.mrf.mxu0
        %v1365 = vadd.f32 0.0, %v1364
        %1366 = vmatmul.f32.gmra.mxu0 %v1303
        %v1367 = vpop.f32.mrf.mxu0
        %v1368 = vadd.f32 0.0, %v1367
        %1369 = vmatmul.f32.gmra.mxu0 %v1306
        %v1370 = vpop.f32.mrf.mxu0
        %v1371 = vadd.f32 0.0, %v1370
        %1372 = vmatmul.f32.gmra.mxu0 %v1309
        %v1373 = vpop.f32.mrf.mxu0
        %v1374 = vadd.f32 0.0, %v1373
        %1375 = vmatmul.f32.gmra.mxu0 %v1312
        %v1376 = vpop.f32.mrf.mxu0
        %v1377 = vadd.f32 0.0, %v1376
        %1378 = vdwg.mxu0
        %1379 = vxpose.xlu0.b32.start [1/16] %v650, 128
        %1380 = vxpose.xlu0.b32.cont [2/16] 0.0, 128
        %1381 = vxpose.xlu0.b32.cont [3/16] 0.0, 128
        %1382 = vxpose.xlu0.b32.cont [4/16] 0.0, 128
        %1383 = vxpose.xlu0.b32.cont [5/16] 0.0, 128
        %1384 = vxpose.xlu0.b32.cont [6/16] 0.0, 128
        %1385 = vxpose.xlu0.b32.cont [7/16] 0.0, 128
        %1386 = vxpose.xlu0.b32.cont [8/16] 0.0, 128
        %1387 = vxpose.xlu0.b32.cont [9/16] 0.0, 128
        %1388 = vxpose.xlu0.b32.cont [10/16] 0.0, 128
        %1389 = vxpose.xlu0.b32.cont [11/16] 0.0, 128
        %1390 = vxpose.xlu0.b32.cont [12/16] 0.0, 128
        %1391 = vxpose.xlu0.b32.cont [13/16] 0.0, 128
        %1392 = vxpose.xlu0.b32.cont [14/16] 0.0, 128
        %1393 = vxpose.xlu0.b32.cont [15/16] 0.0, 128
        %1394 = vxpose.xlu0.b32.end [16/16] 0.0, 128
        %v1395 = vpop.trf.xlu0
        %v1396 = vpop.trf.xlu0
        %v1397 = vpop.trf.xlu0
        %v1398 = vpop.trf.xlu0
        %v1399 = vpop.trf.xlu0
        %v1400 = vpop.trf.xlu0
        %v1401 = vpop.trf.xlu0
        %v1402 = vpop.trf.xlu0
        %v1403 = vpop.trf.xlu0
        %v1404 = vpop.trf.xlu0
        %v1405 = vpop.trf.xlu0
        %v1406 = vpop.trf.xlu0
        %v1407 = vpop.trf.xlu0
        %v1408 = vpop.trf.xlu0
        %v1409 = vpop.trf.xlu0
        %v1410 = vpop.trf.xlu0
        %v1412 = vsel %vm685, %v1395, 0
        %v1415 = vsel %vm685, %v1396, 0
        %v1418 = vsel %vm685, %v1397, 0
        %v1421 = vsel %vm685, %v1398, 0
        %v1424 = vsel %vm685, %v1399, 0
        %v1427 = vsel %vm685, %v1400, 0
        %v1430 = vsel %vm685, %v1401, 0
        %v1433 = vsel %vm685, %v1402, 0
        %v1436 = vsel %vm685, %v1403, 0
        %v1439 = vsel %vm685, %v1404, 0
        %v1442 = vsel %vm685, %v1405, 0
        %v1445 = vsel %vm685, %v1406, 0
        %v1448 = vsel %vm685, %v1407, 0
        %v1451 = vsel %vm685, %v1408, 0
        %v1454 = vsel %vm685, %v1409, 0
        %v1457 = vsel %vm685, %v1410, 0
        %1459 = vmatpush.msra.mxu0 0.0
        %1460 = vmatpush.msra.mxu0 0.0
        %1461 = vmatpush.msra.mxu0 0.0
        %1462 = vmatpush.msra.mxu0 0.0
        %1463 = vmatpush.msra.mxu0 0.0
        %1464 = vmatpush.msra.mxu0 0.0
        %1465 = vmatpush.msra.mxu0 0.0
        %1466 = vmatpush.msra.mxu0 0.0
        %1467 = vmatpush.msra.mxu0 0.0
        %1468 = vmatpush.msra.mxu0 0.0
        %1469 = vmatpush.msra.mxu0 0.0
        %1470 = vmatpush.msra.mxu0 0.0
        %1471 = vmatpush.msra.mxu0 0.0
        %1472 = vmatpush.msra.mxu0 0.0
        %1473 = vmatpush.msra.mxu0 0.0
        %1474 = vmatpush.msra.mxu0 %v259
        %1475 = vmatmul.f32.gmra.mxu0 %v1412
        %v1476 = vpop.f32.mrf.mxu0
        %v1477 = vadd.f32 0.0, %v1476
        %1478 = vmatmul.f32.gmra.mxu0 %v1415
        %v1479 = vpop.f32.mrf.mxu0
        %v1480 = vadd.f32 0.0, %v1479
        %1481 = vmatmul.f32.gmra.mxu0 %v1418
        %v1482 = vpop.f32.mrf.mxu0
        %v1483 = vadd.f32 0.0, %v1482
        %1484 = vmatmul.f32.gmra.mxu0 %v1421
        %v1485 = vpop.f32.mrf.mxu0
        %v1486 = vadd.f32 0.0, %v1485
        %1487 = vmatmul.f32.gmra.mxu0 %v1424
        %v1488 = vpop.f32.mrf.mxu0
        %v1489 = vadd.f32 0.0, %v1488
        %1490 = vmatmul.f32.gmra.mxu0 %v1427
        %v1491 = vpop.f32.mrf.mxu0
        %v1492 = vadd.f32 0.0, %v1491
        %1493 = vmatmul.f32.gmra.mxu0 %v1430
        %v1494 = vpop.f32.mrf.mxu0
        %v1495 = vadd.f32 0.0, %v1494
        %1496 = vmatmul.f32.gmra.mxu0 %v1433
        %v1497 = vpop.f32.mrf.mxu0
        %v1498 = vadd.f32 0.0, %v1497
        %1499 = vmatmul.f32.gmra.mxu0 %v1436
        %v1500 = vpop.f32.mrf.mxu0
        %v1501 = vadd.f32 0.0, %v1500
        %1502 = vmatmul.f32.gmra.mxu0 %v1439
        %v1503 = vpop.f32.mrf.mxu0
        %v1504 = vadd.f32 0.0, %v1503
        %1505 = vmatmul.f32.gmra.mxu0 %v1442
        %v1506 = vpop.f32.mrf.mxu0
        %v1507 = vadd.f32 0.0, %v1506
        %1508 = vmatmul.f32.gmra.mxu0 %v1445
        %v1509 = vpop.f32.mrf.mxu0
        %v1510 = vadd.f32 0.0, %v1509
        %1511 = vmatmul.f32.gmra.mxu0 %v1448
        %v1512 = vpop.f32.mrf.mxu0
        %v1513 = vadd.f32 0.0, %v1512
        %1514 = vmatmul.f32.gmra.mxu0 %v1451
        %v1515 = vpop.f32.mrf.mxu0
        %v1516 = vadd.f32 0.0, %v1515
        %1517 = vmatmul.f32.gmra.mxu0 %v1454
        %v1518 = vpop.f32.mrf.mxu0
        %v1519 = vadd.f32 0.0, %v1518
        %1520 = vmatmul.f32.gmra.mxu0 %v1457
        %v1521 = vpop.f32.mrf.mxu0
        %v1522 = vadd.f32 0.0, %v1521
        %1523 = vdwg.mxu0
        %1524 = vxpose.xlu0.b32.start [1/16] %v651, 128
        %1525 = vxpose.xlu0.b32.cont [2/16] 0.0, 128
        %1526 = vxpose.xlu0.b32.cont [3/16] 0.0, 128
        %1527 = vxpose.xlu0.b32.cont [4/16] 0.0, 128
        %1528 = vxpose.xlu0.b32.cont [5/16] 0.0, 128
        %1529 = vxpose.xlu0.b32.cont [6/16] 0.0, 128
        %1530 = vxpose.xlu0.b32.cont [7/16] 0.0, 128
        %1531 = vxpose.xlu0.b32.cont [8/16] 0.0, 128
        %1532 = vxpose.xlu0.b32.cont [9/16] 0.0, 128
        %1533 = vxpose.xlu0.b32.cont [10/16] 0.0, 128
        %1534 = vxpose.xlu0.b32.cont [11/16] 0.0, 128
        %1535 = vxpose.xlu0.b32.cont [12/16] 0.0, 128
        %1536 = vxpose.xlu0.b32.cont [13/16] 0.0, 128
        %1537 = vxpose.xlu0.b32.cont [14/16] 0.0, 128
        %1538 = vxpose.xlu0.b32.cont [15/16] 0.0, 128
        %1539 = vxpose.xlu0.b32.end [16/16] 0.0, 128
        %v1540 = vpop.trf.xlu0
        %v1541 = vpop.trf.xlu0
        %v1542 = vpop.trf.xlu0
        %v1543 = vpop.trf.xlu0
        %v1544 = vpop.trf.xlu0
        %v1545 = vpop.trf.xlu0
        %v1546 = vpop.trf.xlu0
        %v1547 = vpop.trf.xlu0
        %v1548 = vpop.trf.xlu0
        %v1549 = vpop.trf.xlu0
        %v1550 = vpop.trf.xlu0
        %v1551 = vpop.trf.xlu0
        %v1552 = vpop.trf.xlu0
        %v1553 = vpop.trf.xlu0
        %v1554 = vpop.trf.xlu0
        %v1555 = vpop.trf.xlu0
        %v1557 = vsel %vm685, %v1540, 0
        %v1560 = vsel %vm685, %v1541, 0
        %v1563 = vsel %vm685, %v1542, 0
        %v1566 = vsel %vm685, %v1543, 0
        %v1569 = vsel %vm685, %v1544, 0
        %v1572 = vsel %vm685, %v1545, 0
        %v1575 = vsel %vm685, %v1546, 0
        %v1578 = vsel %vm685, %v1547, 0
        %v1581 = vsel %vm685, %v1548, 0
        %v1584 = vsel %vm685, %v1549, 0
        %v1587 = vsel %vm685, %v1550, 0
        %v1590 = vsel %vm685, %v1551, 0
        %v1593 = vsel %vm685, %v1552, 0
        %v1596 = vsel %vm685, %v1553, 0
        %v1599 = vsel %vm685, %v1554, 0
        %v1602 = vsel %vm685, %v1555, 0
        %1604 = vmatpush.msra.mxu0 0.0
        %1605 = vmatpush.msra.mxu0 0.0
        %1606 = vmatpush.msra.mxu0 0.0
        %1607 = vmatpush.msra.mxu0 0.0
        %1608 = vmatpush.msra.mxu0 0.0
        %1609 = vmatpush.msra.mxu0 0.0
        %1610 = vmatpush.msra.mxu0 0.0
        %1611 = vmatpush.msra.mxu0 0.0
        %1612 = vmatpush.msra.mxu0 0.0
        %1613 = vmatpush.msra.mxu0 0.0
        %1614 = vmatpush.msra.mxu0 0.0
        %1615 = vmatpush.msra.mxu0 0.0
        %1616 = vmatpush.msra.mxu0 0.0
        %1617 = vmatpush.msra.mxu0 0.0
        %1618 = vmatpush.msra.mxu0 0.0
        %1619 = vmatpush.msra.mxu0 %v260
        %1620 = vmatmul.f32.gmra.mxu0 %v1557
        %v1621 = vpop.f32.mrf.mxu0
        %v1622 = vadd.f32 0.0, %v1621
        %1623 = vmatmul.f32.gmra.mxu0 %v1560
        %v1624 = vpop.f32.mrf.mxu0
        %v1625 = vadd.f32 0.0, %v1624
        %1626 = vmatmul.f32.gmra.mxu0 %v1563
        %v1627 = vpop.f32.mrf.mxu0
        %v1628 = vadd.f32 0.0, %v1627
        %1629 = vmatmul.f32.gmra.mxu0 %v1566
        %v1630 = vpop.f32.mrf.mxu0
        %v1631 = vadd.f32 0.0, %v1630
        %1632 = vmatmul.f32.gmra.mxu0 %v1569
        %v1633 = vpop.f32.mrf.mxu0
        %v1634 = vadd.f32 0.0, %v1633
        %1635 = vmatmul.f32.gmra.mxu0 %v1572
        %v1636 = vpop.f32.mrf.mxu0
        %v1637 = vadd.f32 0.0, %v1636
        %1638 = vmatmul.f32.gmra.mxu0 %v1575
        %v1639 = vpop.f32.mrf.mxu0
        %v1640 = vadd.f32 0.0, %v1639
        %1641 = vmatmul.f32.gmra.mxu0 %v1578
        %v1642 = vpop.f32.mrf.mxu0
        %v1643 = vadd.f32 0.0, %v1642
        %1644 = vmatmul.f32.gmra.mxu0 %v1581
        %v1645 = vpop.f32.mrf.mxu0
        %v1646 = vadd.f32 0.0, %v1645
        %1647 = vmatmul.f32.gmra.mxu0 %v1584
        %v1648 = vpop.f32.mrf.mxu0
        %v1649 = vadd.f32 0.0, %v1648
        %1650 = vmatmul.f32.gmra.mxu0 %v1587
        %v1651 = vpop.f32.mrf.mxu0
        %v1652 = vadd.f32 0.0, %v1651
        %1653 = vmatmul.f32.gmra.mxu0 %v1590
        %v1654 = vpop.f32.mrf.mxu0
        %v1655 = vadd.f32 0.0, %v1654
        %1656 = vmatmul.f32.gmra.mxu0 %v1593
        %v1657 = vpop.f32.mrf.mxu0
        %v1658 = vadd.f32 0.0, %v1657
        %1659 = vmatmul.f32.gmra.mxu0 %v1596
        %v1660 = vpop.f32.mrf.mxu0
        %v1661 = vadd.f32 0.0, %v1660
        %1662 = vmatmul.f32.gmra.mxu0 %v1599
        %v1663 = vpop.f32.mrf.mxu0
        %v1664 = vadd.f32 0.0, %v1663
        %1665 = vmatmul.f32.gmra.mxu0 %v1602
        %v1666 = vpop.f32.mrf.mxu0
        %v1667 = vadd.f32 0.0, %v1666
        %1668 = vdwg.mxu0
        %1669 = vxpose.xlu0.b32.start [1/16] %v652, 128
        %1670 = vxpose.xlu0.b32.cont [2/16] 0.0, 128
        %1671 = vxpose.xlu0.b32.cont [3/16] 0.0, 128
        %1672 = vxpose.xlu0.b32.cont [4/16] 0.0, 128
        %1673 = vxpose.xlu0.b32.cont [5/16] 0.0, 128
        %1674 = vxpose.xlu0.b32.cont [6/16] 0.0, 128
        %1675 = vxpose.xlu0.b32.cont [7/16] 0.0, 128
        %1676 = vxpose.xlu0.b32.cont [8/16] 0.0, 128
        %1677 = vxpose.xlu0.b32.cont [9/16] 0.0, 128
        %1678 = vxpose.xlu0.b32.cont [10/16] 0.0, 128
        %1679 = vxpose.xlu0.b32.cont [11/16] 0.0, 128
        %1680 = vxpose.xlu0.b32.cont [12/16] 0.0, 128
        %1681 = vxpose.xlu0.b32.cont [13/16] 0.0, 128
        %1682 = vxpose.xlu0.b32.cont [14/16] 0.0, 128
        %1683 = vxpose.xlu0.b32.cont [15/16] 0.0, 128
        %1684 = vxpose.xlu0.b32.end [16/16] 0.0, 128
        %v1685 = vpop.trf.xlu0
        %v1686 = vpop.trf.xlu0
        %v1687 = vpop.trf.xlu0
        %v1688 = vpop.trf.xlu0
        %v1689 = vpop.trf.xlu0
        %v1690 = vpop.trf.xlu0
        %v1691 = vpop.trf.xlu0
        %v1692 = vpop.trf.xlu0
        %v1693 = vpop.trf.xlu0
        %v1694 = vpop.trf.xlu0
        %v1695 = vpop.trf.xlu0
        %v1696 = vpop.trf.xlu0
        %v1697 = vpop.trf.xlu0
        %v1698 = vpop.trf.xlu0
        %v1699 = vpop.trf.xlu0
        %v1700 = vpop.trf.xlu0
        %v1702 = vsel %vm685, %v1685, 0
        %v1705 = vsel %vm685, %v1686, 0
        %v1708 = vsel %vm685, %v1687, 0
        %v1711 = vsel %vm685, %v1688, 0
        %v1714 = vsel %vm685, %v1689, 0
        %v1717 = vsel %vm685, %v1690, 0
        %v1720 = vsel %vm685, %v1691, 0
        %v1723 = vsel %vm685, %v1692, 0
        %v1726 = vsel %vm685, %v1693, 0
        %v1729 = vsel %vm685, %v1694, 0
        %v1732 = vsel %vm685, %v1695, 0
        %v1735 = vsel %vm685, %v1696, 0
        %v1738 = vsel %vm685, %v1697, 0
        %v1741 = vsel %vm685, %v1698, 0
        %v1744 = vsel %vm685, %v1699, 0
        %v1747 = vsel %vm685, %v1700, 0
        %1749 = vmatpush.msra.mxu0 0.0
        %1750 = vmatpush.msra.mxu0 0.0
        %1751 = vmatpush.msra.mxu0 0.0
        %1752 = vmatpush.msra.mxu0 0.0
        %1753 = vmatpush.msra.mxu0 0.0
        %1754 = vmatpush.msra.mxu0 0.0
        %1755 = vmatpush.msra.mxu0 0.0
        %1756 = vmatpush.msra.mxu0 0.0
        %1757 = vmatpush.msra.mxu0 0.0
        %1758 = vmatpush.msra.mxu0 0.0
        %1759 = vmatpush.msra.mxu0 0.0
        %1760 = vmatpush.msra.mxu0 0.0
        %1761 = vmatpush.msra.mxu0 0.0
        %1762 = vmatpush.msra.mxu0 0.0
        %1763 = vmatpush.msra.mxu0 0.0
        %1764 = vmatpush.msra.mxu0 %v261
        %1765 = vmatmul.f32.gmra.mxu0 %v1702
        %v1766 = vpop.f32.mrf.mxu0
        %v1767 = vadd.f32 0.0, %v1766
        %1768 = vmatmul.f32.gmra.mxu0 %v1705
        %v1769 = vpop.f32.mrf.mxu0
        %v1770 = vadd.f32 0.0, %v1769
        %1771 = vmatmul.f32.gmra.mxu0 %v1708
        %v1772 = vpop.f32.mrf.mxu0
        %v1773 = vadd.f32 0.0, %v1772
        %1774 = vmatmul.f32.gmra.mxu0 %v1711
        %v1775 = vpop.f32.mrf.mxu0
        %v1776 = vadd.f32 0.0, %v1775
        %1777 = vmatmul.f32.gmra.mxu0 %v1714
        %v1778 = vpop.f32.mrf.mxu0
        %v1779 = vadd.f32 0.0, %v1778
        %1780 = vmatmul.f32.gmra.mxu0 %v1717
        %v1781 = vpop.f32.mrf.mxu0
        %v1782 = vadd.f32 0.0, %v1781
        %1783 = vmatmul.f32.gmra.mxu0 %v1720
        %v1784 = vpop.f32.mrf.mxu0
        %v1785 = vadd.f32 0.0, %v1784
        %1786 = vmatmul.f32.gmra.mxu0 %v1723
        %v1787 = vpop.f32.mrf.mxu0
        %v1788 = vadd.f32 0.0, %v1787
        %1789 = vmatmul.f32.gmra.mxu0 %v1726
        %v1790 = vpop.f32.mrf.mxu0
        %v1791 = vadd.f32 0.0, %v1790
        %1792 = vmatmul.f32.gmra.mxu0 %v1729
        %v1793 = vpop.f32.mrf.mxu0
        %v1794 = vadd.f32 0.0, %v1793
        %1795 = vmatmul.f32.gmra.mxu0 %v1732
        %v1796 = vpop.f32.mrf.mxu0
        %v1797 = vadd.f32 0.0, %v1796
        %1798 = vmatmul.f32.gmra.mxu0 %v1735
        %v1799 = vpop.f32.mrf.mxu0
        %v1800 = vadd.f32 0.0, %v1799
        %1801 = vmatmul.f32.gmra.mxu0 %v1738
        %v1802 = vpop.f32.mrf.mxu0
        %v1803 = vadd.f32 0.0, %v1802
        %1804 = vmatmul.f32.gmra.mxu0 %v1741
        %v1805 = vpop.f32.mrf.mxu0
        %v1806 = vadd.f32 0.0, %v1805
        %1807 = vmatmul.f32.gmra.mxu0 %v1744
        %v1808 = vpop.f32.mrf.mxu0
        %v1809 = vadd.f32 0.0, %v1808
        %1810 = vmatmul.f32.gmra.mxu0 %v1747
        %v1811 = vpop.f32.mrf.mxu0
        %v1812 = vadd.f32 0.0, %v1811
        %1813 = vdwg.mxu0
        %1814 = vst [vmem:[%s247] sm:$0xff] %v752
        %1815 = vst [vmem:[%s247 + $0x8] sm:$0xff] %v755
        %1816 = vst [vmem:[%s247 + $0x10] sm:$0xff] %v758
        %1817 = vst [vmem:[%s247 + $0x18] sm:$0xff] %v761
        %1818 = vst [vmem:[%s247 + $0x20] sm:$0xff] %v764
        %1819 = vst [vmem:[%s247 + $0x28] sm:$0xff] %v767
        %1820 = vst [vmem:[%s247 + $0x30] sm:$0xff] %v770
        %1821 = vst [vmem:[%s247 + $0x38] sm:$0xff] %v773
        %1822 = vst [vmem:[%s247 + $0x40] sm:$0xff] %v776
        %1823 = vst [vmem:[%s247 + $0x48] sm:$0xff] %v779
        %1824 = vst [vmem:[%s247 + $0x50] sm:$0xff] %v782
        %1825 = vst [vmem:[%s247 + $0x58] sm:$0xff] %v785
        %1826 = vst [vmem:[%s247 + $0x60] sm:$0xff] %v788
        %1827 = vst [vmem:[%s247 + $0x68] sm:$0xff] %v791
        %1828 = vst [vmem:[%s247 + $0x70] sm:$0xff] %v794
        %1829 = vst [vmem:[%s247 + $0x78] sm:$0xff] %v797
        %1830 = vst [vmem:[%s247 + $0x80] sm:$0xff] %v897
        %1831 = vst [vmem:[%s247 + $0x88] sm:$0xff] %v900
        %1832 = vst [vmem:[%s247 + $0x90] sm:$0xff] %v903
        %1833 = vst [vmem:[%s247 + $0x98] sm:$0xff] %v906
        %1834 = vst [vmem:[%s247 + $0xa0] sm:$0xff] %v909
        %1835 = vst [vmem:[%s247 + $0xa8] sm:$0xff] %v912
        %1836 = vst [vmem:[%s247 + $0xb0] sm:$0xff] %v915
        %1837 = vst [vmem:[%s247 + $0xb8] sm:$0xff] %v918
        %1838 = vst [vmem:[%s247 + $0xc0] sm:$0xff] %v921
        %1839 = vst [vmem:[%s247 + $0xc8] sm:$0xff] %v924
        %1840 = vst [vmem:[%s247 + $0xd0] sm:$0xff] %v927
        %1841 = vst [vmem:[%s247 + $0xd8] sm:$0xff] %v930
        %1842 = vst [vmem:[%s247 + $0xe0] sm:$0xff] %v933
        %1843 = vst [vmem:[%s247 + $0xe8] sm:$0xff] %v936
        %1844 = vst [vmem:[%s247 + $0xf0] sm:$0xff] %v939
        %1845 = vst [vmem:[%s247 + $0xf8] sm:$0xff] %v942
        %1846 = vst [vmem:[%s247 + $0x100] sm:$0xff] %v1042
        %1847 = vst [vmem:[%s247 + $0x108] sm:$0xff] %v1045
        %1848 = vst [vmem:[%s247 + $0x110] sm:$0xff] %v1048
        %1849 = vst [vmem:[%s247 + $0x118] sm:$0xff] %v1051
        %1850 = vst [vmem:[%s247 + $0x120] sm:$0xff] %v1054
        %1851 = vst [vmem:[%s247 + $0x128] sm:$0xff] %v1057
        %1852 = vst [vmem:[%s247 + $0x130] sm:$0xff] %v1060
        %1853 = vst [vmem:[%s247 + $0x138] sm:$0xff] %v1063
        %1854 = vst [vmem:[%s247 + $0x140] sm:$0xff] %v1066
        %1855 = vst [vmem:[%s247 + $0x148] sm:$0xff] %v1069
        %1856 = vst [vmem:[%s247 + $0x150] sm:$0xff] %v1072
        %1857 = vst [vmem:[%s247 + $0x158] sm:$0xff] %v1075
        %1858 = vst [vmem:[%s247 + $0x160] sm:$0xff] %v1078
        %1859 = vst [vmem:[%s247 + $0x168] sm:$0xff] %v1081
        %1860 = vst [vmem:[%s247 + $0x170] sm:$0xff] %v1084
        %1861 = vst [vmem:[%s247 + $0x178] sm:$0xff] %v1087
        %1862 = vst [vmem:[%s247 + $0x180] sm:$0xff] %v1187
        %1863 = vst [vmem:[%s247 + $0x188] sm:$0xff] %v1190
        %1864 = vst [vmem:[%s247 + $0x190] sm:$0xff] %v1193
        %1865 = vst [vmem:[%s247 + $0x198] sm:$0xff] %v1196
        %1866 = vst [vmem:[%s247 + $0x1a0] sm:$0xff] %v1199
        %1867 = vst [vmem:[%s247 + $0x1a8] sm:$0xff] %v1202
        %1868 = vst [vmem:[%s247 + $0x1b0] sm:$0xff] %v1205
        %1869 = vst [vmem:[%s247 + $0x1b8] sm:$0xff] %v1208
        %1870 = vst [vmem:[%s247 + $0x1c0] sm:$0xff] %v1211
        %1871 = vst [vmem:[%s247 + $0x1c8] sm:$0xff] %v1214
        %1872 = vst [vmem:[%s247 + $0x1d0] sm:$0xff] %v1217
        %1873 = vst [vmem:[%s247 + $0x1d8] sm:$0xff] %v1220
        %1874 = vst [vmem:[%s247 + $0x1e0] sm:$0xff] %v1223
        %1875 = vst [vmem:[%s247 + $0x1e8] sm:$0xff] %v1226
        %1876 = vst [vmem:[%s247 + $0x1f0] sm:$0xff] %v1229
        %1877 = vst [vmem:[%s247 + $0x1f8] sm:$0xff] %v1232
        %1878 = vst [vmem:[%s247 + $0x200] sm:$0xff] %v1332
        %1879 = vst [vmem:[%s247 + $0x208] sm:$0xff] %v1335
        %1880 = vst [vmem:[%s247 + $0x210] sm:$0xff] %v1338
        %1881 = vst [vmem:[%s247 + $0x218] sm:$0xff] %v1341
        %1882 = vst [vmem:[%s247 + $0x220] sm:$0xff] %v1344
        %1883 = vst [vmem:[%s247 + $0x228] sm:$0xff] %v1347
        %1884 = vst [vmem:[%s247 + $0x230] sm:$0xff] %v1350
        %1885 = vst [vmem:[%s247 + $0x238] sm:$0xff] %v1353
        %1886 = vst [vmem:[%s247 + $0x240] sm:$0xff] %v1356
        %1887 = vst [vmem:[%s247 + $0x248] sm:$0xff] %v1359
        %1888 = vst [vmem:[%s247 + $0x250] sm:$0xff] %v1362
        %1889 = vst [vmem:[%s247 + $0x258] sm:$0xff] %v1365
        %1890 = vst [vmem:[%s247 + $0x260] sm:$0xff] %v1368
        %1891 = vst [vmem:[%s247 + $0x268] sm:$0xff] %v1371
        %1892 = vst [vmem:[%s247 + $0x270] sm:$0xff] %v1374
        %1893 = vst [vmem:[%s247 + $0x278] sm:$0xff] %v1377
        %1894 = vst [vmem:[%s247 + $0x280] sm:$0xff] %v1477
        %1895 = vst [vmem:[%s247 + $0x288] sm:$0xff] %v1480
        %1896 = vst [vmem:[%s247 + $0x290] sm:$0xff] %v1483
        %1897 = vst [vmem:[%s247 + $0x298] sm:$0xff] %v1486
        %1898 = vst [vmem:[%s247 + $0x2a0] sm:$0xff] %v1489
        %1899 = vst [vmem:[%s247 + $0x2a8] sm:$0xff] %v1492
        %1900 = vst [vmem:[%s247 + $0x2b0] sm:$0xff] %v1495
        %1901 = vst [vmem:[%s247 + $0x2b8] sm:$0xff] %v1498
        %1902 = vst [vmem:[%s247 + $0x2c0] sm:$0xff] %v1501
        %1903 = vst [vmem:[%s247 + $0x2c8] sm:$0xff] %v1504
        %1904 = vst [vmem:[%s247 + $0x2d0] sm:$0xff] %v1507
        %1905 = vst [vmem:[%s247 + $0x2d8] sm:$0xff] %v1510
        %1906 = vst [vmem:[%s247 + $0x2e0] sm:$0xff] %v1513
        %1907 = vst [vmem:[%s247 + $0x2e8] sm:$0xff] %v1516
        %1908 = vst [vmem:[%s247 + $0x2f0] sm:$0xff] %v1519
        %1909 = vst [vmem:[%s247 + $0x2f8] sm:$0xff] %v1522
        %1910 = vst [vmem:[%s247 + $0x300] sm:$0xff] %v1622
        %1911 = vst [vmem:[%s247 + $0x308] sm:$0xff] %v1625
        %1912 = vst [vmem:[%s247 + $0x310] sm:$0xff] %v1628
        %1913 = vst [vmem:[%s247 + $0x318] sm:$0xff] %v1631
        %1914 = vst [vmem:[%s247 + $0x320] sm:$0xff] %v1634
        %1915 = vst [vmem:[%s247 + $0x328] sm:$0xff] %v1637
        %1916 = vst [vmem:[%s247 + $0x330] sm:$0xff] %v1640
        %1917 = vst [vmem:[%s247 + $0x338] sm:$0xff] %v1643
        %1918 = vst [vmem:[%s247 + $0x340] sm:$0xff] %v1646
        %1919 = vst [vmem:[%s247 + $0x348] sm:$0xff] %v1649
        %1920 = vst [vmem:[%s247 + $0x350] sm:$0xff] %v1652
        %1921 = vst [vmem:[%s247 + $0x358] sm:$0xff] %v1655
        %1922 = vst [vmem:[%s247 + $0x360] sm:$0xff] %v1658
        %1923 = vst [vmem:[%s247 + $0x368] sm:$0xff] %v1661
        %1924 = vst [vmem:[%s247 + $0x370] sm:$0xff] %v1664
        %1925 = vst [vmem:[%s247 + $0x378] sm:$0xff] %v1667
        %1926 = vst [vmem:[%s247 + $0x380] sm:$0xff] %v1767
        %1927 = vst [vmem:[%s247 + $0x388] sm:$0xff] %v1770
        %1928 = vst [vmem:[%s247 + $0x390] sm:$0xff] %v1773
        %1929 = vst [vmem:[%s247 + $0x398] sm:$0xff] %v1776
        %1930 = vst [vmem:[%s247 + $0x3a0] sm:$0xff] %v1779
        %1931 = vst [vmem:[%s247 + $0x3a8] sm:$0xff] %v1782
        %1932 = vst [vmem:[%s247 + $0x3b0] sm:$0xff] %v1785
        %1933 = vst [vmem:[%s247 + $0x3b8] sm:$0xff] %v1788
        %1934 = vst [vmem:[%s247 + $0x3c0] sm:$0xff] %v1791
        %1935 = vst [vmem:[%s247 + $0x3c8] sm:$0xff] %v1794
        %1936 = vst [vmem:[%s247 + $0x3d0] sm:$0xff] %v1797
        %1937 = vst [vmem:[%s247 + $0x3d8] sm:$0xff] %v1800
        %1938 = vst [vmem:[%s247 + $0x3e0] sm:$0xff] %v1803
        %1939 = vst [vmem:[%s247 + $0x3e8] sm:$0xff] %v1806
        %1940 = vst [vmem:[%s247 + $0x3f0] sm:$0xff] %v1809
        %1941 = vst [vmem:[%s247 + $0x3f8] sm:$0xff] %v1812
        %s1942 = sand.u32 %s124, 1
        %s1943 = scalar_lea.sflag [#allocation4], %s1942
        %s1944 = sand.u32 %s124, 1
        %s1945 = smul.addr %s1944, 1024
        %s1946 = scalar_lea.vmem [#allocation7], %s1945
        // Predicated region
        $region45: #{tpu_custom_call.1} parent=35 // pred_check
          %p1947 = pneg %p134
        $region46: #{tpu_custom_call.1} parent=35 // pred_check_branch
          %1949 = sbr.rel (%p1947) target = $region48
        $region47: #{tpu_custom_call.1} parent=35 // pred_region
          %s1950 = smul.u32 8, %s22
          %1952 = vsyncadd %s1943, 0
          %s1953 = smul.addr %s1950, 16
          %s1954 = smul.addr %s1953, 8
          %s1955 = scalar_lea.hbm %s4, %s1954
          %s1956 = sshll.u32 %s1946, 4
          %s1957 = int_to_ptr.vmem [resolvable:$true] %s1956
          %s1958 = sshll.u32 %s1955, 4
          %s1959 = int_to_ptr.hbm [resolvable:$true] %s1958
          %1964 = dma.vmem_to_hbm [thread:$0]  %s1957, 16384, %s1959, %s1943, 128, 128, 8
        $region48: #{tpu_custom_call.1} parent=35 // pred_fallthru
          _
      $region36: #{tpu_custom_call.1} parent=5 // pred_fallthru
        _
      %p1965 = scmp.le.s32.totalorder 2, %s17
      // Predicated region
      $region49: #{tpu_custom_call.1} parent=5 // pred_check
        %p1966 = pneg %p1965
      $region50: #{tpu_custom_call.1} parent=5 // pred_check_branch
        %1968 = sbr.rel (%p1966) target = $region52
      $region51: #{tpu_custom_call.1} parent=5 // pred_region
        %s1969 = ssub.s32 %s17, 2
        // Predicated region
        $region53: #{tpu_custom_call.1} parent=51 // pred_check
          %p1970 = pneg %p140
        $region54: #{tpu_custom_call.1} parent=51 // pred_check_branch
          %1972 = sbr.rel (%p1970) target = $region56
        $region55: #{tpu_custom_call.1} parent=51 // pred_region
          %s1973 = sand.u32 %s125, 1
          %s1974 = scalar_lea.sflag [#allocation4], %s1973
          %s1975 = sand.u32 %s125, 1
          %s1976 = smul.addr %s1975, 1024
          %s1977 = scalar_lea.vmem [#allocation7], %s1976
          %1979 = dma.done %s1974, 16384
        $region56: #{tpu_custom_call.1} parent=51 // pred_fallthru
          _
      $region52: #{tpu_custom_call.1} parent=5 // pred_fallthru
        _
    $region6: #{tpu_custom_call.1} parent=1 // loop_footer
      %s21 = sadd.s32 1, %s17
    $region7: #{tpu_custom_call.1} parent=1 // loop_footer_branch
      %16 = sbr.rel target = $region3
    $region8: #{tpu_custom_call.1} parent=1 // loop_exit
      _
    %1980 = vsyncpa [#allocation3], 1
    %s1981 = scalar_lea.sflag [#allocation3], 1
    %1982 = vsyncpa %s1981, 1
    %1983 = vsyncpa [#allocation6], 1
    %1984 = vsyncpa [#allocation4], 1
    %s1985 = scalar_lea.sflag [#allocation4], 1
    %1986 = vsyncpa %s1985, 1

</llo_original>
